<compile_context>
chip_gen: v7x
topology: tpu7x:2x2x1
jax: 0.10.0
libtpu: 0.0.40
codegen_flags: <defaults>
</compile_context>

<pallas_src>
import functools

import jax
import jax.numpy as jnp
from jax import lax
from jax.experimental import pallas as pl
from jax.experimental.pallas import tpu as pltpu


# ----------------------------- Pallas kernel --------------------------------

def _silu(y):
    return y * (1.0 / (1.0 + jnp.exp(-y)))


def _c3_fused_kernel(x_ref, w1_ref, b1_ref, w2_ref, b2_ref,
                     wm1_ref, bm1_ref, wm2_ref, bm2_ref,
                     w3a_ref, w3b_ref, b3_ref,
                     o_ref, hpad_ref, *, img_w):
    """One grid step == one image; channel-first layout (C, H*W), M on lanes."""
    x = x_ref[0]                                    # (C1, M) f32
    m = x.shape[-1]
    iw = img_w
    pad = iw + 1                                    # flat halo width

    # cv1 / cv2 : 1x1 conv (BN folded into weights) + SiLU
    y1 = _silu(jnp.dot(w1_ref[...], x, preferred_element_type=jnp.float32)
               + b1_ref[...])
    y2 = _silu(jnp.dot(w2_ref[...], x, preferred_element_type=jnp.float32)
               + b2_ref[...])

    # Bottleneck.cv1 : 1x1 conv + SiLU
    h = _silu(jnp.dot(wm1_ref[...], y1, preferred_element_type=jnp.float32)
              + bm1_ref[...])

    # Bottleneck.cv2 : 3x3 conv (pad=1, stride=1), accumulated as 9 shifted
    # matmuls read from a zero-padded flat line buffer in VMEM scratch.
    hpad_ref[...] = jnp.zeros_like(hpad_ref)
    hpad_ref[:, pad:pad + m] = h

    lane = lax.broadcasted_iota(jnp.int32, (1, m), 1)
    col = lane % iw
    mask_l = col >= 1                # x-1 stays inside the row
    mask_r = col <= iw - 2           # x+1 stays inside the row

    acc = jnp.zeros_like(h)
    k = 0
    for dy in (-1, 0, 1):
        for dx in (-1, 0, 1):
            s = dy * iw + dx
            sh = hpad_ref[:, pad + s:pad + s + m]   # (c_, M); zero outside image rows
            if dx == -1:
                sh = jnp.where(mask_l, sh, 0.0)
            elif dx == 1:
                sh = jnp.where(mask_r, sh, 0.0)
            acc = acc + jnp.dot(wm2_ref[k], sh,
                                preferred_element_type=jnp.float32)
            k += 1
    b_out = y1 + _silu(acc + bm2_ref[...])          # post-activation shortcut

    # cv3 on the (virtual) concat [bottleneck_out ; y2] -- concat folded into
    # two accumulated matmuls with the split cv3 weight.
    out = _silu(jnp.dot(w3a_ref[...], b_out, preferred_element_type=jnp.float32)
                + jnp.dot(w3b_ref[...], y2, preferred_element_type=jnp.float32)
                + b3_ref[...])
    o_ref[0] = out.astype(o_ref.dtype)


# ------------------------------ wrapper --------------------------------------

def _const_spec(arr):
    zeros = (0,) * arr.ndim
    return pl.BlockSpec(arr.shape, lambda b, _z=zeros: _z)


def c3_forward_nchw(x_nchw, p):
    """C3 forward (n=1, shortcut=True, g=1) as one fused Pallas kernel; NCHW in/out."""
    B, C1, H, W = x_nchw.shape
    M = H * W
    ops = fold_kernel_params(p)
    c_ = ops["w1"].shape[0]
    C2 = ops["w3a"].shape[0]

    x_flat = x_nchw.reshape(B, C1, M).astype(jnp.float32)  # NCHW is already channel-first

    operand_order = ["w1", "b1", "w2", "b2", "wm1", "bm1", "wm2", "bm2",
                     "w3a", "w3b", "b3"]
    in_specs = [pl.BlockSpec((1, C1, M), lambda b: (b, 0, 0))]
    args = [x_flat]
    for name in operand_order:
        arr = ops[name]
        in_specs.append(_const_spec(arr))
        args.append(arr)

    out = pl.pallas_call(
        functools.partial(_c3_fused_kernel, img_w=W),
        out_shape=jax.ShapeDtypeStruct((B, C2, M), jnp.float32),
        grid_spec=pltpu.PrefetchScalarGridSpec(
            num_scalar_prefetch=0,
            grid=(B,),
            in_specs=in_specs,
            out_specs=pl.BlockSpec((1, C2, M), lambda b: (b, 0, 0)),
            scratch_shapes=[pltpu.VMEM((c_, M + 2 * (W + 1)), jnp.float32)],
        ),
        compiler_params=pltpu.CompilerParams(
            dimension_semantics=("parallel",)),
    )(*args)
    return out.reshape(B, C2, H, W)


# ------------------------------ parameters -----------------------------------

def make_conv_params(key, c_in, c_out, k):
    """Deterministic Conv(+BN eval mode) params in torch layout."""
    kw, kg, kb, km, kv = jax.random.split(key, 5)
    w = jax.random.normal(kw, (c_out, c_in, k, k), jnp.float32)
    w = w * (1.0 / (c_in * k * k) ** 0.5)
    gamma = jax.random.uniform(kg, (c_out,), jnp.float32, 0.5, 1.5)
    beta = jax.random.normal(kb, (c_out,), jnp.float32) * 0.1
    mean = jax.random.normal(km, (c_out,), jnp.float32) * 0.1
    var = jax.random.uniform(kv, (c_out,), jnp.float32, 0.5, 1.5)
    eps = 1e-5                                # nn.BatchNorm2d default
    scale = gamma / jnp.sqrt(var + eps)
    bias = beta - mean * scale
    return {"w": w, "scale": scale, "bias": bias, "k": k}


def make_c3_params(key, c1, c2, e=0.5):
    c_ = int(c2 * e)
    ks = jax.random.split(key, 5)
    return {
        "cv1":    make_conv_params(ks[0], c1, c_, 1),
        "cv2":    make_conv_params(ks[1], c1, c_, 1),
        "cv3":    make_conv_params(ks[2], 2 * c_, c2, 1),
        "m0_cv1": make_conv_params(ks[3], c_, c_, 1),   # Bottleneck.cv1 (e=1.0)
        "m0_cv2": make_conv_params(ks[4], c_, c_, 3),   # Bottleneck.cv2 3x3
    }


def _fold_1x1(prm):
    w = prm["w"][:, :, 0, 0] * prm["scale"][:, None]          # (c_out, c_in)
    return w, prm["bias"][:, None]


def _fold_3x3(prm):
    c_out, c_in = prm["w"].shape[:2]
    w = jnp.transpose(prm["w"], (2, 3, 0, 1)).reshape(9, c_out, c_in)
    w = w * prm["scale"][None, :, None]                       # (9, c_out, c_in)
    return w, prm["bias"][:, None]


def fold_kernel_params(p):
    """Fold eval-mode BN into channel-first matmul weights; split cv3 weight."""
    w1, b1 = _fold_1x1(p["cv1"])
    w2, b2 = _fold_1x1(p["cv2"])
    wm1, bm1 = _fold_1x1(p["m0_cv1"])
    wm2, bm2 = _fold_3x3(p["m0_cv2"])
    w3, b3 = _fold_1x1(p["cv3"])
    c_ = w1.shape[0]
    return {"w1": w1, "b1": b1, "w2": w2, "b2": b2,
            "wm1": wm1, "bm1": bm1, "wm2": wm2, "bm2": bm2,
            "w3a": w3[:, :c_], "w3b": w3[:, c_:], "b3": b3}


# --------------------------- pure-JAX reference ------------------------------

def _conv_ref(x, prm):
    k = prm["k"]
    w_hwio = jnp.transpose(prm["w"], (2, 3, 1, 0))
    y = lax.conv_general_dilated(
        x, w_hwio, window_strides=(1, 1), padding=[(k // 2, k // 2)] * 2,
        dimension_numbers=("NHWC", "HWIO", "NHWC"))
    y = y * prm["scale"] + prm["bias"]
    return y * jax.nn.sigmoid(y)


def c3_ref_nhwc(x, p):
    y1 = _conv_ref(x, p["cv1"])
    y2 = _conv_ref(x, p["cv2"])
    b = y1 + _conv_ref(_conv_ref(y1, p["m0_cv1"]), p["m0_cv2"])
    return _conv_ref(jnp.concatenate([b, y2], axis=-1), p["cv3"])


# --------------------------------- main ---------------------------------------

if __name__ == "__main__":
    key = jax.random.PRNGKey(0)
    k_x, k_p = jax.random.split(key)

    B, C1, H, W = 2, 4, 16, 16        # NCHW, matching the PyTorch module
    C2 = 4                            # C3(c1=4, c2=4, n=1, shortcut=True, e=0.5)

    x_nchw = jax.random.normal(k_x, (B, C1, H, W), jnp.float32)
    params = make_c3_params(k_p, C1, C2, e=0.5)

    out = c3_forward_nchw(x_nchw, params)
    out = jax.block_until_ready(out)
    assert out.shape == (B, C2, H, W), out.shape

    # correctness check vs plain-JAX reference (eval-mode BN, SiLU)
    ref = jnp.transpose(
        c3_ref_nhwc(jnp.transpose(x_nchw, (0, 2, 3, 1)), params), (0, 3, 1, 2))
    ref = jax.block_until_ready(ref)
    err = float(jnp.max(jnp.abs(out - ref)))
    assert err < 5e-4, f"mismatch vs reference: {err}"

    print("KERNEL_OK")
</pallas_src>

<mosaic_0001>
module attributes {stable_mosaic.version = 11 : i64} {
  func.func @_c3_fused_kernel(%arg0: i32, %arg1: memref<1x4x256xf32, #tpu.memory_space<vmem>>, %arg2: memref<2x4xf32, #tpu.memory_space<vmem>>, %arg3: memref<2x1xf32, #tpu.memory_space<vmem>>, %arg4: memref<2x4xf32, #tpu.memory_space<vmem>>, %arg5: memref<2x1xf32, #tpu.memory_space<vmem>>, %arg6: memref<2x2xf32, #tpu.memory_space<vmem>>, %arg7: memref<2x1xf32, #tpu.memory_space<vmem>>, %arg8: memref<9x2x2xf32, #tpu.memory_space<vmem>>, %arg9: memref<2x1xf32, #tpu.memory_space<vmem>>, %arg10: memref<4x2xf32, #tpu.memory_space<vmem>>, %arg11: memref<4x2xf32, #tpu.memory_space<vmem>>, %arg12: memref<4x1xf32, #tpu.memory_space<vmem>>, %arg13: memref<1x4x256xf32, #tpu.memory_space<vmem>>, %arg14: memref<2x290xf32, #tpu.memory_space<vmem>>) attributes {dimension_semantics = [#tpu.dimension_semantics<parallel>], iteration_bounds = array<i64: 2>, scalar_prefetch = 0 : i64, scratch_operands = 1 : i64, tpu.core_type = #tpu.core_type<tc>, window_params = [{transform_indices = @transform_0, window_bounds = array<i64: 1, 4, 256>}, {pipeline_mode = #tpu.pipeline_mode<synchronous>, transform_indices = @transform_1, window_bounds = array<i64: 2, 4>}, {pipeline_mode = #tpu.pipeline_mode<synchronous>, transform_indices = @transform_2, window_bounds = array<i64: 2, 1>}, {pipeline_mode = #tpu.pipeline_mode<synchronous>, transform_indices = @transform_3, window_bounds = array<i64: 2, 4>}, {pipeline_mode = #tpu.pipeline_mode<synchronous>, transform_indices = @transform_4, window_bounds = array<i64: 2, 1>}, {pipeline_mode = #tpu.pipeline_mode<synchronous>, transform_indices = @transform_5, window_bounds = array<i64: 2, 2>}, {pipeline_mode = #tpu.pipeline_mode<synchronous>, transform_indices = @transform_6, window_bounds = array<i64: 2, 1>}, {pipeline_mode = #tpu.pipeline_mode<synchronous>, transform_indices = @transform_7, window_bounds = array<i64: 9, 2, 2>}, {pipeline_mode = #tpu.pipeline_mode<synchronous>, transform_indices = @transform_8, window_bounds = array<i64: 2, 1>}, {pipeline_mode = #tpu.pipeline_mode<synchronous>, transform_indices = @transform_9, window_bounds = array<i64: 4, 2>}, {pipeline_mode = #tpu.pipeline_mode<synchronous>, transform_indices = @transform_10, window_bounds = array<i64: 4, 2>}, {pipeline_mode = #tpu.pipeline_mode<synchronous>, transform_indices = @transform_11, window_bounds = array<i64: 4, 1>}, {transform_indices = @transform_12, window_bounds = array<i64: 1, 4, 256>}]} {
    %c0 = arith.constant 0 : index
    %c0_0 = arith.constant 0 : index
    %c0_1 = arith.constant 0 : index
    %0 = vector.load %arg1[%c0, %c0_0, %c0_1] : memref<1x4x256xf32, #tpu.memory_space<vmem>>, vector<1x4x256xf32>
    %1 = vector.shape_cast %0 : vector<1x4x256xf32> to vector<4x256xf32>
    %c0_2 = arith.constant 0 : index
    %c0_3 = arith.constant 0 : index
    %2 = vector.load %arg2[%c0_2, %c0_3] : memref<2x4xf32, #tpu.memory_space<vmem>>, vector<2x4xf32>
    %cst = arith.constant dense<0.000000e+00> : vector<2x256xf32>
    %3 = tpu.matmul %2, %1, %cst {dimension_numbers = #tpu.dot_dimension_numbers<[1], [0], [0], [1], [0, 0, 1, 1], [], []>} : vector<2x4xf32>, vector<4x256xf32>, vector<2x256xf32> -> vector<2x256xf32>
    %c0_4 = arith.constant 0 : index
    %c0_5 = arith.constant 0 : index
    %4 = vector.load %arg3[%c0_4, %c0_5] : memref<2x1xf32, #tpu.memory_space<vmem>>, vector<2x1xf32>
    %5 = vector.broadcast %4 : vector<2x1xf32> to vector<2x256xf32>
    %6 = arith.addf %3, %5 : vector<2x256xf32>
    %cst_6 = arith.constant 0.000000e+00 : f32
    %7 = vector.broadcast %cst_6 : f32 to vector<2x256xf32>
    %8 = arith.subf %7, %6 : vector<2x256xf32>
    %9 = math.exp %8 : vector<2x256xf32>
    %cst_7 = arith.constant 1.000000e+00 : f32
    %10 = vector.broadcast %cst_7 : f32 to vector<2x256xf32>
    %11 = arith.addf %10, %9 : vector<2x256xf32>
    %cst_8 = arith.constant 1.000000e+00 : f32
    %12 = vector.broadcast %cst_8 : f32 to vector<2x256xf32>
    %13 = arith.divf %12, %11 : vector<2x256xf32>
    %14 = arith.mulf %6, %13 : vector<2x256xf32>
    %c0_9 = arith.constant 0 : index
    %c0_10 = arith.constant 0 : index
    %15 = vector.load %arg4[%c0_9, %c0_10] : memref<2x4xf32, #tpu.memory_space<vmem>>, vector<2x4xf32>
    %cst_11 = arith.constant dense<0.000000e+00> : vector<2x256xf32>
    %16 = tpu.matmul %15, %1, %cst_11 {dimension_numbers = #tpu.dot_dimension_numbers<[1], [0], [0], [1], [0, 0, 1, 1], [], []>} : vector<2x4xf32>, vector<4x256xf32>, vector<2x256xf32> -> vector<2x256xf32>
    %c0_12 = arith.constant 0 : index
    %c0_13 = arith.constant 0 : index
    %17 = vector.load %arg5[%c0_12, %c0_13] : memref<2x1xf32, #tpu.memory_space<vmem>>, vector<2x1xf32>
    %18 = vector.broadcast %17 : vector<2x1xf32> to vector<2x256xf32>
    %19 = arith.addf %16, %18 : vector<2x256xf32>
    %cst_14 = arith.constant 0.000000e+00 : f32
    %20 = vector.broadcast %cst_14 : f32 to vector<2x256xf32>
    %21 = arith.subf %20, %19 : vector<2x256xf32>
    %22 = math.exp %21 : vector<2x256xf32>
    %cst_15 = arith.constant 1.000000e+00 : f32
    %23 = vector.broadcast %cst_15 : f32 to vector<2x256xf32>
    %24 = arith.addf %23, %22 : vector<2x256xf32>
    %cst_16 = arith.constant 1.000000e+00 : f32
    %25 = vector.broadcast %cst_16 : f32 to vector<2x256xf32>
    %26 = arith.divf %25, %24 : vector<2x256xf32>
    %27 = arith.mulf %19, %26 : vector<2x256xf32>
    %c0_17 = arith.constant 0 : index
    %c0_18 = arith.constant 0 : index
    %28 = vector.load %arg6[%c0_17, %c0_18] : memref<2x2xf32, #tpu.memory_space<vmem>>, vector<2x2xf32>
    %cst_19 = arith.constant dense<0.000000e+00> : vector<2x256xf32>
    %29 = tpu.matmul %28, %14, %cst_19 {dimension_numbers = #tpu.dot_dimension_numbers<[1], [0], [0], [1], [0, 0, 1, 1], [], []>} : vector<2x2xf32>, vector<2x256xf32>, vector<2x256xf32> -> vector<2x256xf32>
    %c0_20 = arith.constant 0 : index
    %c0_21 = arith.constant 0 : index
    %30 = vector.load %arg7[%c0_20, %c0_21] : memref<2x1xf32, #tpu.memory_space<vmem>>, vector<2x1xf32>
    %31 = vector.broadcast %30 : vector<2x1xf32> to vector<2x256xf32>
    %32 = arith.addf %29, %31 : vector<2x256xf32>
    %cst_22 = arith.constant 0.000000e+00 : f32
    %33 = vector.broadcast %cst_22 : f32 to vector<2x256xf32>
    %34 = arith.subf %33, %32 : vector<2x256xf32>
    %35 = math.exp %34 : vector<2x256xf32>
    %cst_23 = arith.constant 1.000000e+00 : f32
    %36 = vector.broadcast %cst_23 : f32 to vector<2x256xf32>
    %37 = arith.addf %36, %35 : vector<2x256xf32>
    %cst_24 = arith.constant 1.000000e+00 : f32
    %38 = vector.broadcast %cst_24 : f32 to vector<2x256xf32>
    %39 = arith.divf %38, %37 : vector<2x256xf32>
    %40 = arith.mulf %32, %39 : vector<2x256xf32>
    %cst_25 = arith.constant 0.000000e+00 : f32
    %41 = vector.broadcast %cst_25 : f32 to vector<2x290xf32>
    %c0_26 = arith.constant 0 : index
    %c0_27 = arith.constant 0 : index
    %42 = vector.load %arg14[%c0_26, %c0_27] : memref<2x290xf32, #tpu.memory_space<vmem>>, vector<2x290xf32>
    tpu.vector_store %arg14[%c0_26, %c0_27], %41 {strides = array<i32>} : memref<2x290xf32, #tpu.memory_space<vmem>>, vector<2x290xf32>,
    %c0_28 = arith.constant 0 : index
    %c17 = arith.constant 17 : index
    %43 = vector.load %arg14[%c0_28, %c17] : memref<2x290xf32, #tpu.memory_space<vmem>>, vector<2x256xf32>
    tpu.vector_store %arg14[%c0_28, %c17], %40 {strides = array<i32>} : memref<2x290xf32, #tpu.memory_space<vmem>>, vector<2x256xf32>,
    %44 = tpu.iota {dimensions = array<i32: 1>} : vector<1x256xi32>
    %c16_i32 = arith.constant 16 : i32
    %c0_i32 = arith.constant 0 : i32
    %45 = arith.cmpi eq, %c16_i32, %c0_i32 : i32
    %c1_i32 = arith.constant 1 : i32
    %46 = arith.select %45, %c1_i32, %c16_i32 : i32
    %47 = vector.broadcast %46 : i32 to vector<1x256xi32>
    %48 = arith.remsi %44, %47 : vector<1x256xi32>
    %c0_i32_29 = arith.constant 0 : i32
    %49 = vector.broadcast %c0_i32_29 : i32 to vector<1x256xi32>
    %50 = arith.cmpi ne, %48, %49 : vector<1x256xi32>
    %c0_i32_30 = arith.constant 0 : i32
    %51 = vector.broadcast %c0_i32_30 : i32 to vector<1x256xi32>
    %52 = arith.cmpi slt, %48, %51 : vector<1x256xi32>
    %c0_i32_31 = arith.constant 0 : i32
    %53 = arith.cmpi slt, %46, %c0_i32_31 : i32
    %54 = vector.broadcast %53 : i1 to vector<1x256xi1>
    %55 = vector.broadcast %54 : vector<1x256xi1> to vector<1x256xi1>
    %56 = arith.xori %52, %55 : vector<1x256xi1>
    %57 = arith.andi %56, %50 : vector<1x256xi1>
    %58 = vector.broadcast %46 : i32 to vector<1x256xi32>
    %59 = arith.addi %48, %58 : vector<1x256xi32>
    %60 = arith.select %57, %59, %48 : vector<1x256xi1>, vector<1x256xi32>
    %c1_i32_32 = arith.constant 1 : i32
    %61 = vector.broadcast %c1_i32_32 : i32 to vector<1x256xi32>
    %62 = arith.cmpi sge, %60, %61 : vector<1x256xi32>
    %c14_i32 = arith.constant 14 : i32
    %63 = vector.broadcast %c14_i32 : i32 to vector<1x256xi32>
    %64 = arith.cmpi sle, %60, %63 : vector<1x256xi32>
    %cst_33 = arith.constant 0.000000e+00 : f32
    %65 = vector.broadcast %cst_33 : f32 to vector<2x256xf32>
    %c0_34 = arith.constant 0 : index
    %c0_35 = arith.constant 0 : index
    %66 = vector.load %arg14[%c0_34, %c0_35] : memref<2x290xf32, #tpu.memory_space<vmem>>, vector<2x256xf32>
    %cst_36 = arith.constant 0.000000e+00 : f32
    %67 = vector.shape_cast %62 : vector<1x256xi1> to vector<1x256xi1>
    %68 = vector.broadcast %67 : vector<1x256xi1> to vector<2x256xi1>
    %69 = vector.broadcast %cst_36 : f32 to vector<2x256xf32>
    %70 = arith.select %68, %66, %69 : vector<2x256xi1>, vector<2x256xf32>
    %c0_37 = arith.constant 0 : index
    %c0_38 = arith.constant 0 : index
    %c0_39 = arith.constant 0 : index
    %71 = vector.load %arg8[%c0_37, %c0_38, %c0_39] : memref<9x2x2xf32, #tpu.memory_space<vmem>>, vector<1x2x2xf32>
    %72 = vector.shape_cast %71 : vector<1x2x2xf32> to vector<2x2xf32>
    %cst_40 = arith.constant dense<0.000000e+00> : vector<2x256xf32>
    %73 = tpu.matmul %72, %70, %cst_40 {dimension_numbers = #tpu.dot_dimension_numbers<[1], [0], [0], [1], [0, 0, 1, 1], [], []>} : vector<2x2xf32>, vector<2x256xf32>, vector<2x256xf32> -> vector<2x256xf32>
    %74 = arith.addf %65, %73 : vector<2x256xf32>
    %c0_41 = arith.constant 0 : index
    %c1 = arith.constant 1 : index
    %75 = vector.load %arg14[%c0_41, %c1] : memref<2x290xf32, #tpu.memory_space<vmem>>, vector<2x256xf32>
    %c1_42 = arith.constant 1 : index
    %c0_43 = arith.constant 0 : index
    %c0_44 = arith.constant 0 : index
    %76 = vector.load %arg8[%c1_42, %c0_43, %c0_44] : memref<9x2x2xf32, #tpu.memory_space<vmem>>, vector<1x2x2xf32>
    %77 = vector.shape_cast %76 : vector<1x2x2xf32> to vector<2x2xf32>
    %cst_45 = arith.constant dense<0.000000e+00> : vector<2x256xf32>
    %78 = tpu.matmul %77, %75, %cst_45 {dimension_numbers = #tpu.dot_dimension_numbers<[1], [0], [0], [1], [0, 0, 1, 1], [], []>} : vector<2x2xf32>, vector<2x256xf32>, vector<2x256xf32> -> vector<2x256xf32>
    %79 = arith.addf %74, %78 : vector<2x256xf32>
    %c0_46 = arith.constant 0 : index
    %c2 = arith.constant 2 : index
    %80 = vector.load %arg14[%c0_46, %c2] : memref<2x290xf32, #tpu.memory_space<vmem>>, vector<2x256xf32>
    %cst_47 = arith.constant 0.000000e+00 : f32
    %81 = vector.shape_cast %64 : vector<1x256xi1> to vector<1x256xi1>
    %82 = vector.broadcast %81 : vector<1x256xi1> to vector<2x256xi1>
    %83 = vector.broadcast %cst_47 : f32 to vector<2x256xf32>
    %84 = arith.select %82, %80, %83 : vector<2x256xi1>, vector<2x256xf32>
    %c2_48 = arith.constant 2 : index
    %c0_49 = arith.constant 0 : index
    %c0_50 = arith.constant 0 : index
    %85 = vector.load %arg8[%c2_48, %c0_49, %c0_50] : memref<9x2x2xf32, #tpu.memory_space<vmem>>, vector<1x2x2xf32>
    %86 = vector.shape_cast %85 : vector<1x2x2xf32> to vector<2x2xf32>
    %cst_51 = arith.constant dense<0.000000e+00> : vector<2x256xf32>
    %87 = tpu.matmul %86, %84, %cst_51 {dimension_numbers = #tpu.dot_dimension_numbers<[1], [0], [0], [1], [0, 0, 1, 1], [], []>} : vector<2x2xf32>, vector<2x256xf32>, vector<2x256xf32> -> vector<2x256xf32>
    %88 = arith.addf %79, %87 : vector<2x256xf32>
    %c0_52 = arith.constant 0 : index
    %c16 = arith.constant 16 : index
    %89 = vector.load %arg14[%c0_52, %c16] : memref<2x290xf32, #tpu.memory_space<vmem>>, vector<2x256xf32>
    %cst_53 = arith.constant 0.000000e+00 : f32
    %90 = vector.shape_cast %62 : vector<1x256xi1> to vector<1x256xi1>
    %91 = vector.broadcast %90 : vector<1x256xi1> to vector<2x256xi1>
    %92 = vector.broadcast %cst_53 : f32 to vector<2x256xf32>
    %93 = arith.select %91, %89, %92 : vector<2x256xi1>, vector<2x256xf32>
    %c3 = arith.constant 3 : index
    %c0_54 = arith.constant 0 : index
    %c0_55 = arith.constant 0 : index
    %94 = vector.load %arg8[%c3, %c0_54, %c0_55] : memref<9x2x2xf32, #tpu.memory_space<vmem>>, vector<1x2x2xf32>
    %95 = vector.shape_cast %94 : vector<1x2x2xf32> to vector<2x2xf32>
    %cst_56 = arith.constant dense<0.000000e+00> : vector<2x256xf32>
    %96 = tpu.matmul %95, %93, %cst_56 {dimension_numbers = #tpu.dot_dimension_numbers<[1], [0], [0], [1], [0, 0, 1, 1], [], []>} : vector<2x2xf32>, vector<2x256xf32>, vector<2x256xf32> -> vector<2x256xf32>
    %97 = arith.addf %88, %96 : vector<2x256xf32>
    %c0_57 = arith.constant 0 : index
    %c17_58 = arith.constant 17 : index
    %98 = vector.load %arg14[%c0_57, %c17_58] : memref<2x290xf32, #tpu.memory_space<vmem>>, vector<2x256xf32>
    %c4 = arith.constant 4 : index
    %c0_59 = arith.constant 0 : index
    %c0_60 = arith.constant 0 : index
    %99 = vector.load %arg8[%c4, %c0_59, %c0_60] : memref<9x2x2xf32, #tpu.memory_space<vmem>>, vector<1x2x2xf32>
    %100 = vector.shape_cast %99 : vector<1x2x2xf32> to vector<2x2xf32>
    %cst_61 = arith.constant dense<0.000000e+00> : vector<2x256xf32>
    %101 = tpu.matmul %100, %98, %cst_61 {dimension_numbers = #tpu.dot_dimension_numbers<[1], [0], [0], [1], [0, 0, 1, 1], [], []>} : vector<2x2xf32>, vector<2x256xf32>, vector<2x256xf32> -> vector<2x256xf32>
    %102 = arith.addf %97, %101 : vector<2x256xf32>
    %c0_62 = arith.constant 0 : index
    %c18 = arith.constant 18 : index
    %103 = vector.load %arg14[%c0_62, %c18] : memref<2x290xf32, #tpu.memory_space<vmem>>, vector<2x256xf32>
    %cst_63 = arith.constant 0.000000e+00 : f32
    %104 = vector.shape_cast %64 : vector<1x256xi1> to vector<1x256xi1>
    %105 = vector.broadcast %104 : vector<1x256xi1> to vector<2x256xi1>
    %106 = vector.broadcast %cst_63 : f32 to vector<2x256xf32>
    %107 = arith.select %105, %103, %106 : vector<2x256xi1>, vector<2x256xf32>
    %c5 = arith.constant 5 : index
    %c0_64 = arith.constant 0 : index
    %c0_65 = arith.constant 0 : index
    %108 = vector.load %arg8[%c5, %c0_64, %c0_65] : memref<9x2x2xf32, #tpu.memory_space<vmem>>, vector<1x2x2xf32>
    %109 = vector.shape_cast %108 : vector<1x2x2xf32> to vector<2x2xf32>
    %cst_66 = arith.constant dense<0.000000e+00> : vector<2x256xf32>
    %110 = tpu.matmul %109, %107, %cst_66 {dimension_numbers = #tpu.dot_dimension_numbers<[1], [0], [0], [1], [0, 0, 1, 1], [], []>} : vector<2x2xf32>, vector<2x256xf32>, vector<2x256xf32> -> vector<2x256xf32>
    %111 = arith.addf %102, %110 : vector<2x256xf32>
    %c0_67 = arith.constant 0 : index
    %c32 = arith.constant 32 : index
    %112 = vector.load %arg14[%c0_67, %c32] : memref<2x290xf32, #tpu.memory_space<vmem>>, vector<2x256xf32>
    %cst_68 = arith.constant 0.000000e+00 : f32
    %113 = vector.shape_cast %62 : vector<1x256xi1> to vector<1x256xi1>
    %114 = vector.broadcast %113 : vector<1x256xi1> to vector<2x256xi1>
    %115 = vector.broadcast %cst_68 : f32 to vector<2x256xf32>
    %116 = arith.select %114, %112, %115 : vector<2x256xi1>, vector<2x256xf32>
    %c6 = arith.constant 6 : index
    %c0_69 = arith.constant 0 : index
    %c0_70 = arith.constant 0 : index
    %117 = vector.load %arg8[%c6, %c0_69, %c0_70] : memref<9x2x2xf32, #tpu.memory_space<vmem>>, vector<1x2x2xf32>
    %118 = vector.shape_cast %117 : vector<1x2x2xf32> to vector<2x2xf32>
    %cst_71 = arith.constant dense<0.000000e+00> : vector<2x256xf32>
    %119 = tpu.matmul %118, %116, %cst_71 {dimension_numbers = #tpu.dot_dimension_numbers<[1], [0], [0], [1], [0, 0, 1, 1], [], []>} : vector<2x2xf32>, vector<2x256xf32>, vector<2x256xf32> -> vector<2x256xf32>
    %120 = arith.addf %111, %119 : vector<2x256xf32>
    %c0_72 = arith.constant 0 : index
    %c33 = arith.constant 33 : index
    %121 = vector.load %arg14[%c0_72, %c33] : memref<2x290xf32, #tpu.memory_space<vmem>>, vector<2x256xf32>
    %c7 = arith.constant 7 : index
    %c0_73 = arith.constant 0 : index
    %c0_74 = arith.constant 0 : index
    %122 = vector.load %arg8[%c7, %c0_73, %c0_74] : memref<9x2x2xf32, #tpu.memory_space<vmem>>, vector<1x2x2xf32>
    %123 = vector.shape_cast %122 : vector<1x2x2xf32> to vector<2x2xf32>
    %cst_75 = arith.constant dense<0.000000e+00> : vector<2x256xf32>
    %124 = tpu.matmul %123, %121, %cst_75 {dimension_numbers = #tpu.dot_dimension_numbers<[1], [0], [0], [1], [0, 0, 1, 1], [], []>} : vector<2x2xf32>, vector<2x256xf32>, vector<2x256xf32> -> vector<2x256xf32>
    %125 = arith.addf %120, %124 : vector<2x256xf32>
    %c0_76 = arith.constant 0 : index
    %c34 = arith.constant 34 : index
    %126 = vector.load %arg14[%c0_76, %c34] : memref<2x290xf32, #tpu.memory_space<vmem>>, vector<2x256xf32>
    %cst_77 = arith.constant 0.000000e+00 : f32
    %127 = vector.shape_cast %64 : vector<1x256xi1> to vector<1x256xi1>
    %128 = vector.broadcast %127 : vector<1x256xi1> to vector<2x256xi1>
    %129 = vector.broadcast %cst_77 : f32 to vector<2x256xf32>
    %130 = arith.select %128, %126, %129 : vector<2x256xi1>, vector<2x256xf32>
    %c8 = arith.constant 8 : index
    %c0_78 = arith.constant 0 : index
    %c0_79 = arith.constant 0 : index
    %131 = vector.load %arg8[%c8, %c0_78, %c0_79] : memref<9x2x2xf32, #tpu.memory_space<vmem>>, vector<1x2x2xf32>
    %132 = vector.shape_cast %131 : vector<1x2x2xf32> to vector<2x2xf32>
    %cst_80 = arith.constant dense<0.000000e+00> : vector<2x256xf32>
    %133 = tpu.matmul %132, %130, %cst_80 {dimension_numbers = #tpu.dot_dimension_numbers<[1], [0], [0], [1], [0, 0, 1, 1], [], []>} : vector<2x2xf32>, vector<2x256xf32>, vector<2x256xf32> -> vector<2x256xf32>
    %134 = arith.addf %125, %133 : vector<2x256xf32>
    %c0_81 = arith.constant 0 : index
    %c0_82 = arith.constant 0 : index
    %135 = vector.load %arg9[%c0_81, %c0_82] : memref<2x1xf32, #tpu.memory_space<vmem>>, vector<2x1xf32>
    %136 = vector.broadcast %135 : vector<2x1xf32> to vector<2x256xf32>
    %137 = arith.addf %134, %136 : vector<2x256xf32>
    %cst_83 = arith.constant 0.000000e+00 : f32
    %138 = vector.broadcast %cst_83 : f32 to vector<2x256xf32>
    %139 = arith.subf %138, %137 : vector<2x256xf32>
    %140 = math.exp %139 : vector<2x256xf32>
    %cst_84 = arith.constant 1.000000e+00 : f32
    %141 = vector.broadcast %cst_84 : f32 to vector<2x256xf32>
    %142 = arith.addf %141, %140 : vector<2x256xf32>
    %cst_85 = arith.constant 1.000000e+00 : f32
    %143 = vector.broadcast %cst_85 : f32 to vector<2x256xf32>
    %144 = arith.divf %143, %142 : vector<2x256xf32>
    %145 = arith.mulf %137, %144 : vector<2x256xf32>
    %146 = arith.addf %14, %145 : vector<2x256xf32>
    %c0_86 = arith.constant 0 : index
    %c0_87 = arith.constant 0 : index
    %147 = vector.load %arg10[%c0_86, %c0_87] : memref<4x2xf32, #tpu.memory_space<vmem>>, vector<4x2xf32>
    %cst_88 = arith.constant dense<0.000000e+00> : vector<4x256xf32>
    %148 = tpu.matmul %147, %146, %cst_88 {dimension_numbers = #tpu.dot_dimension_numbers<[1], [0], [0], [1], [0, 0, 1, 1], [], []>} : vector<4x2xf32>, vector<2x256xf32>, vector<4x256xf32> -> vector<4x256xf32>
    %c0_89 = arith.constant 0 : index
    %c0_90 = arith.constant 0 : index
    %149 = vector.load %arg11[%c0_89, %c0_90] : memref<4x2xf32, #tpu.memory_space<vmem>>, vector<4x2xf32>
    %cst_91 = arith.constant dense<0.000000e+00> : vector<4x256xf32>
    %150 = tpu.matmul %149, %27, %cst_91 {dimension_numbers = #tpu.dot_dimension_numbers<[1], [0], [0], [1], [0, 0, 1, 1], [], []>} : vector<4x2xf32>, vector<2x256xf32>, vector<4x256xf32> -> vector<4x256xf32>
    %151 = arith.addf %148, %150 : vector<4x256xf32>
    %c0_92 = arith.constant 0 : index
    %c0_93 = arith.constant 0 : index
    %152 = vector.load %arg12[%c0_92, %c0_93] : memref<4x1xf32, #tpu.memory_space<vmem>>, vector<4x1xf32>
    %153 = vector.broadcast %152 : vector<4x1xf32> to vector<4x256xf32>
    %154 = arith.addf %151, %153 : vector<4x256xf32>
    %cst_94 = arith.constant 0.000000e+00 : f32
    %155 = vector.broadcast %cst_94 : f32 to vector<4x256xf32>
    %156 = arith.subf %155, %154 : vector<4x256xf32>
    %157 = math.exp %156 : vector<4x256xf32>
    %cst_95 = arith.constant 1.000000e+00 : f32
    %158 = vector.broadcast %cst_95 : f32 to vector<4x256xf32>
    %159 = arith.addf %158, %157 : vector<4x256xf32>
    %cst_96 = arith.constant 1.000000e+00 : f32
    %160 = vector.broadcast %cst_96 : f32 to vector<4x256xf32>
    %161 = arith.divf %160, %159 : vector<4x256xf32>
    %162 = arith.mulf %154, %161 : vector<4x256xf32>
    %c0_97 = arith.constant 0 : index
    %c0_98 = arith.constant 0 : index
    %c0_99 = arith.constant 0 : index
    %163 = vector.load %arg13[%c0_97, %c0_98, %c0_99] : memref<1x4x256xf32, #tpu.memory_space<vmem>>, vector<1x4x256xf32>
    %164 = vector.shape_cast %163 : vector<1x4x256xf32> to vector<4x256xf32>
    %165 = vector.shape_cast %162 : vector<4x256xf32> to vector<1x4x256xf32>
    tpu.vector_store %arg13[%c0_97, %c0_98, %c0_99], %165 {strides = array<i32>} : memref<1x4x256xf32, #tpu.memory_space<vmem>>, vector<1x4x256xf32>,
    return
  }
  func.func @transform_0(%arg0: i32) -> (i32, i32, i32) {
    %c0_i32 = arith.constant 0 : i32
    %c0_i32_0 = arith.constant 0 : i32
    %c0_i32_1 = arith.constant 0 : i32
    return %arg0, %c0_i32, %c0_i32_0 : i32, i32, i32
  }
  func.func @transform_1(%arg0: i32) -> (i32, i32) {
    %c0_i32 = arith.constant 0 : i32
    %c0_i32_0 = arith.constant 0 : i32
    %c0_i32_1 = arith.constant 0 : i32
    return %c0_i32, %c0_i32_0 : i32, i32
  }
  func.func @transform_2(%arg0: i32) -> (i32, i32) {
    %c0_i32 = arith.constant 0 : i32
    %c0_i32_0 = arith.constant 0 : i32
    %c0_i32_1 = arith.constant 0 : i32
    return %c0_i32, %c0_i32_0 : i32, i32
  }
  func.func @transform_3(%arg0: i32) -> (i32, i32) {
    %c0_i32 = arith.constant 0 : i32
    %c0_i32_0 = arith.constant 0 : i32
    %c0_i32_1 = arith.constant 0 : i32
    return %c0_i32, %c0_i32_0 : i32, i32
  }
  func.func @transform_4(%arg0: i32) -> (i32, i32) {
    %c0_i32 = arith.constant 0 : i32
    %c0_i32_0 = arith.constant 0 : i32
    %c0_i32_1 = arith.constant 0 : i32
    return %c0_i32, %c0_i32_0 : i32, i32
  }
  func.func @transform_5(%arg0: i32) -> (i32, i32) {
    %c0_i32 = arith.constant 0 : i32
    %c0_i32_0 = arith.constant 0 : i32
    %c0_i32_1 = arith.constant 0 : i32
    return %c0_i32, %c0_i32_0 : i32, i32
  }
  func.func @transform_6(%arg0: i32) -> (i32, i32) {
    %c0_i32 = arith.constant 0 : i32
    %c0_i32_0 = arith.constant 0 : i32
    %c0_i32_1 = arith.constant 0 : i32
    return %c0_i32, %c0_i32_0 : i32, i32
  }
  func.func @transform_7(%arg0: i32) -> (i32, i32, i32) {
    %c0_i32 = arith.constant 0 : i32
    %c0_i32_0 = arith.constant 0 : i32
    %c0_i32_1 = arith.constant 0 : i32
    %c0_i32_2 = arith.constant 0 : i32
    return %c0_i32, %c0_i32_0, %c0_i32_1 : i32, i32, i32
  }
  func.func @transform_8(%arg0: i32) -> (i32, i32) {
    %c0_i32 = arith.constant 0 : i32
    %c0_i32_0 = arith.constant 0 : i32
    %c0_i32_1 = arith.constant 0 : i32
    return %c0_i32, %c0_i32_0 : i32, i32
  }
  func.func @transform_9(%arg0: i32) -> (i32, i32) {
    %c0_i32 = arith.constant 0 : i32
    %c0_i32_0 = arith.constant 0 : i32
    %c0_i32_1 = arith.constant 0 : i32
    return %c0_i32, %c0_i32_0 : i32, i32
  }
  func.func @transform_10(%arg0: i32) -> (i32, i32) {
    %c0_i32 = arith.constant 0 : i32
    %c0_i32_0 = arith.constant 0 : i32
    %c0_i32_1 = arith.constant 0 : i32
    return %c0_i32, %c0_i32_0 : i32, i32
  }
  func.func @transform_11(%arg0: i32) -> (i32, i32) {
    %c0_i32 = arith.constant 0 : i32
    %c0_i32_0 = arith.constant 0 : i32
    %c0_i32_1 = arith.constant 0 : i32
    return %c0_i32, %c0_i32_0 : i32, i32
  }
  func.func @transform_12(%arg0: i32) -> (i32, i32, i32) {
    %c0_i32 = arith.constant 0 : i32
    %c0_i32_0 = arith.constant 0 : i32
    %c0_i32_1 = arith.constant 0 : i32
    return %arg0, %c0_i32, %c0_i32_0 : i32, i32, i32
  }
}

</mosaic_0001>

<llo_original>
// kernel: tpu_custom_call.1
$region0: #{tpu_custom_call.1}
  #allocation0 [shape = 'u32[]', space=smem, size = 0x4, offset = 0x4, fixed_abs, tag = 'smem constant byte address 0x4 - core index']
  #allocation1 [shape = 'u32[144,128]{1,0:T(1,128)}', space=vmem, size = 0x12000, scoped, tag = 'internal scratch']
  #allocation2 [shape = 'f32[2,290]{1,0:T(2,128)}', space=vmem, size = 0xc00, scoped, tag = 'scratch operand']
  %s0 = inlined_call_operand.vmem [shape: f32[2,4,256], index: 0, kind: input, shape index: {}]
  %s1 = inlined_call_operand.vmem [shape: f32[2,4], index: 1, kind: input, shape index: {}]
  %s2 = inlined_call_operand.vmem [shape: f32[2,1], index: 2, kind: input, shape index: {}]
  %s3 = inlined_call_operand.vmem [shape: f32[2,4], index: 3, kind: input, shape index: {}]
  %s4 = inlined_call_operand.vmem [shape: f32[2,1], index: 4, kind: input, shape index: {}]
  %s5 = inlined_call_operand.vmem [shape: f32[2,2], index: 5, kind: input, shape index: {}]
  %s6 = inlined_call_operand.vmem [shape: f32[2,1], index: 6, kind: input, shape index: {}]
  %s7 = inlined_call_operand.vmem [shape: f32[9,2,2], index: 7, kind: input, shape index: {}]
  %s8 = inlined_call_operand.vmem [shape: f32[2,1], index: 8, kind: input, shape index: {}]
  %s9 = inlined_call_operand.vmem [shape: f32[4,2], index: 9, kind: input, shape index: {}]
  %s10 = inlined_call_operand.vmem [shape: f32[4,2], index: 10, kind: input, shape index: {}]
  %s11 = inlined_call_operand.vmem [shape: f32[4,1], index: 11, kind: input, shape index: {}]
  %s12 = inlined_call_operand.hbm [shape: f32[2,4,256], index: 12, kind: output, shape index: {}]
  %s13 = sld [smem:[#allocation0]]
  $region81: #{tpu_custom_call.1} parent=0
    _
  %s15 = ssub.s32 1, %s13
  %s16 = scalar_select 0, %s15, %s13
  $region1: #{tpu_custom_call.1} parent=0
    #allocation3 [shape = 'u8[8192]{0}', space=vmem, size = 0x2000, scoped, tag = 'output window, operand 0']
    #allocation4 [shape = 's32[2]{0}', space=sflag, size = 0x8, scoped, tag = 'scoped memory for tpu_custom_call.1']
    %17 = vsyncpa [#allocation4], 0
    %s18 = scalar_lea.sflag [#allocation4], 1
    %19 = vsyncpa %s18, 0
    loop: start=0, step=1, limit=4
    $region2: #{tpu_custom_call.1} parent=1 // loop_pre_header
      _
    $region3: #{tpu_custom_call.1} parent=1 // loop_header
      %s21 = sphi 0, %s25
      %p22 = scmp.ge.s32.totalorder %s21, 4
      %s31 = sphi 0, %s33
      %s34 = sphi 0, %s31
      %s35 = sphi 0, %s34
      %s51 = sphi 0, %s35
      %s55 = sphi 0, %s55
      %s57 = sphi 0, %s55
      %s58 = sphi 0, %s57
      %s72 = sphi 0, %s58
      %s76 = sphi 0, %s76
      %s78 = sphi 0, %s76
      %s79 = sphi 0, %s78
      %s93 = sphi 0, %s79
      %s97 = sphi 0, %s97
      %s99 = sphi 0, %s97
      %s100 = sphi 0, %s99
      %s114 = sphi 0, %s100
      %s118 = sphi 0, %s118
      %s120 = sphi 0, %s118
      %s121 = sphi 0, %s120
      %s135 = sphi 0, %s121
      %s139 = sphi 0, %s139
      %s141 = sphi 0, %s139
      %s142 = sphi 0, %s141
      %s156 = sphi 0, %s142
      %s160 = sphi 0, %s160
      %s162 = sphi 0, %s160
      %s163 = sphi 0, %s162
      %s177 = sphi 0, %s163
      %s181 = sphi 0, %s181
      %s183 = sphi 0, %s181
      %s184 = sphi 0, %s183
      %s198 = sphi 0, %s184
      %s202 = sphi 0, %s202
      %s204 = sphi 0, %s202
      %s205 = sphi 0, %s204
      %s219 = sphi 0, %s205
      %s223 = sphi 0, %s223
      %s225 = sphi 0, %s223
      %s226 = sphi 0, %s225
      %s240 = sphi 0, %s226
      %s244 = sphi 0, %s244
      %s246 = sphi 0, %s244
      %s247 = sphi 0, %s246
      %s261 = sphi 0, %s247
      %s265 = sphi 0, %s265
      %s267 = sphi 0, %s265
      %s268 = sphi 0, %s267
      %s282 = sphi 0, %s268
      %s288 = sphi 0, %s290
      %s291 = sphi 0, %s288
      %s292 = sphi 0, %s291
      %s308 = sphi 0, %s292
    $region4: #{tpu_custom_call.1} parent=1 // loop_header_branch
      %24 = sbr.rel (%p22) target = $region8
    $region5: #{tpu_custom_call.1} parent=1 // loop_body
      %s26 = ssub.s32 %s21, 1
      %s27 = ssub.s32 %s21, 2
      %s28 = sadd.s32 %s21, 1
      %s29 = ssub.s32 %s21, %s28
      %p30 = scmp.eq.s32.totalorder %s29, 0
      %s32 = sadd.s32 %s31, 1
      %s33 = scalar_select %p30, %s31, %s32
      %p36 = pneg %p30
      %p37 = scmp.eq.s32.totalorder %s21, 1
      %p38 = por %p36, %p37
      %p39 = scmp.ne.s32.totalorder %s31, %s34
      %p40 = scmp.eq.s32.totalorder %s21, 0
      %p41 = por %p39, %p40
      %p42 = scmp.ne.s32.totalorder %s31, %s34
      %p43 = scmp.eq.s32.totalorder %s26, 1
      %p44 = por %p42, %p43
      %p45 = scmp.ne.s32.totalorder %s34, %s35
      %p46 = scmp.eq.s32.totalorder %s26, 0
      %p47 = por %p45, %p46
      %p48 = scmp.ne.s32.totalorder %s34, %s35
      %p49 = scmp.eq.s32.totalorder %s27, 1
      %p50 = por %p48, %p49
      %p52 = scmp.ne.s32.totalorder %s35, %s51
      %p53 = scmp.eq.s32.totalorder %s27, 0
      %p54 = por %p52, %p53
      %s56 = sadd.s32 %s55, 1
      %p59 = scmp.eq.s32.totalorder %s21, 1
      %p60 = scmp.ne.s32.totalorder %s55, %s57
      %p61 = scmp.eq.s32.totalorder %s21, 0
      %p62 = por %p60, %p61
      %p63 = scmp.ne.s32.totalorder %s55, %s57
      %p64 = scmp.eq.s32.totalorder %s26, 1
      %p65 = por %p63, %p64
      %p66 = scmp.ne.s32.totalorder %s57, %s58
      %p67 = scmp.eq.s32.totalorder %s26, 0
      %p68 = por %p66, %p67
      %p69 = scmp.ne.s32.totalorder %s57, %s58
      %p70 = scmp.eq.s32.totalorder %s27, 1
      %p71 = por %p69, %p70
      %p73 = scmp.ne.s32.totalorder %s58, %s72
      %p74 = scmp.eq.s32.totalorder %s27, 0
      %p75 = por %p73, %p74
      %s77 = sadd.s32 %s76, 1
      %p80 = scmp.eq.s32.totalorder %s21, 1
      %p81 = scmp.ne.s32.totalorder %s76, %s78
      %p82 = scmp.eq.s32.totalorder %s21, 0
      %p83 = por %p81, %p82
      %p84 = scmp.ne.s32.totalorder %s76, %s78
      %p85 = scmp.eq.s32.totalorder %s26, 1
      %p86 = por %p84, %p85
      %p87 = scmp.ne.s32.totalorder %s78, %s79
      %p88 = scmp.eq.s32.totalorder %s26, 0
      %p89 = por %p87, %p88
      %p90 = scmp.ne.s32.totalorder %s78, %s79
      %p91 = scmp.eq.s32.totalorder %s27, 1
      %p92 = por %p90, %p91
      %p94 = scmp.ne.s32.totalorder %s79, %s93
      %p95 = scmp.eq.s32.totalorder %s27, 0
      %p96 = por %p94, %p95
      %s98 = sadd.s32 %s97, 1
      %p101 = scmp.eq.s32.totalorder %s21, 1
      %p102 = scmp.ne.s32.totalorder %s97, %s99
      %p103 = scmp.eq.s32.totalorder %s21, 0
      %p104 = por %p102, %p103
      %p105 = scmp.ne.s32.totalorder %s97, %s99
      %p106 = scmp.eq.s32.totalorder %s26, 1
      %p107 = por %p105, %p106
      %p108 = scmp.ne.s32.totalorder %s99, %s100
      %p109 = scmp.eq.s32.totalorder %s26, 0
      %p110 = por %p108, %p109
      %p111 = scmp.ne.s32.totalorder %s99, %s100
      %p112 = scmp.eq.s32.totalorder %s27, 1
      %p113 = por %p111, %p112
      %p115 = scmp.ne.s32.totalorder %s100, %s114
      %p116 = scmp.eq.s32.totalorder %s27, 0
      %p117 = por %p115, %p116
      %s119 = sadd.s32 %s118, 1
      %p122 = scmp.eq.s32.totalorder %s21, 1
      %p123 = scmp.ne.s32.totalorder %s118, %s120
      %p124 = scmp.eq.s32.totalorder %s21, 0
      %p125 = por %p123, %p124
      %p126 = scmp.ne.s32.totalorder %s118, %s120
      %p127 = scmp.eq.s32.totalorder %s26, 1
      %p128 = por %p126, %p127
      %p129 = scmp.ne.s32.totalorder %s120, %s121
      %p130 = scmp.eq.s32.totalorder %s26, 0
      %p131 = por %p129, %p130
      %p132 = scmp.ne.s32.totalorder %s120, %s121
      %p133 = scmp.eq.s32.totalorder %s27, 1
      %p134 = por %p132, %p133
      %p136 = scmp.ne.s32.totalorder %s121, %s135
      %p137 = scmp.eq.s32.totalorder %s27, 0
      %p138 = por %p136, %p137
      %s140 = sadd.s32 %s139, 1
      %p143 = scmp.eq.s32.totalorder %s21, 1
      %p144 = scmp.ne.s32.totalorder %s139, %s141
      %p145 = scmp.eq.s32.totalorder %s21, 0
      %p146 = por %p144, %p145
      %p147 = scmp.ne.s32.totalorder %s139, %s141
      %p148 = scmp.eq.s32.totalorder %s26, 1
      %p149 = por %p147, %p148
      %p150 = scmp.ne.s32.totalorder %s141, %s142
      %p151 = scmp.eq.s32.totalorder %s26, 0
      %p152 = por %p150, %p151
      %p153 = scmp.ne.s32.totalorder %s141, %s142
      %p154 = scmp.eq.s32.totalorder %s27, 1
      %p155 = por %p153, %p154
      %p157 = scmp.ne.s32.totalorder %s142, %s156
      %p158 = scmp.eq.s32.totalorder %s27, 0
      %p159 = por %p157, %p158
      %s161 = sadd.s32 %s160, 1
      %p164 = scmp.eq.s32.totalorder %s21, 1
      %p165 = scmp.ne.s32.totalorder %s160, %s162
      %p166 = scmp.eq.s32.totalorder %s21, 0
      %p167 = por %p165, %p166
      %p168 = scmp.ne.s32.totalorder %s160, %s162
      %p169 = scmp.eq.s32.totalorder %s26, 1
      %p170 = por %p168, %p169
      %p171 = scmp.ne.s32.totalorder %s162, %s163
      %p172 = scmp.eq.s32.totalorder %s26, 0
      %p173 = por %p171, %p172
      %p174 = scmp.ne.s32.totalorder %s162, %s163
      %p175 = scmp.eq.s32.totalorder %s27, 1
      %p176 = por %p174, %p175
      %p178 = scmp.ne.s32.totalorder %s163, %s177
      %p179 = scmp.eq.s32.totalorder %s27, 0
      %p180 = por %p178, %p179
      %s182 = sadd.s32 %s181, 1
      %p185 = scmp.eq.s32.totalorder %s21, 1
      %p186 = scmp.ne.s32.totalorder %s181, %s183
      %p187 = scmp.eq.s32.totalorder %s21, 0
      %p188 = por %p186, %p187
      %p189 = scmp.ne.s32.totalorder %s181, %s183
      %p190 = scmp.eq.s32.totalorder %s26, 1
      %p191 = por %p189, %p190
      %p192 = scmp.ne.s32.totalorder %s183, %s184
      %p193 = scmp.eq.s32.totalorder %s26, 0
      %p194 = por %p192, %p193
      %p195 = scmp.ne.s32.totalorder %s183, %s184
      %p196 = scmp.eq.s32.totalorder %s27, 1
      %p197 = por %p195, %p196
      %p199 = scmp.ne.s32.totalorder %s184, %s198
      %p200 = scmp.eq.s32.totalorder %s27, 0
      %p201 = por %p199, %p200
      %s203 = sadd.s32 %s202, 1
      %p206 = scmp.eq.s32.totalorder %s21, 1
      %p207 = scmp.ne.s32.totalorder %s202, %s204
      %p208 = scmp.eq.s32.totalorder %s21, 0
      %p209 = por %p207, %p208
      %p210 = scmp.ne.s32.totalorder %s202, %s204
      %p211 = scmp.eq.s32.totalorder %s26, 1
      %p212 = por %p210, %p211
      %p213 = scmp.ne.s32.totalorder %s204, %s205
      %p214 = scmp.eq.s32.totalorder %s26, 0
      %p215 = por %p213, %p214
      %p216 = scmp.ne.s32.totalorder %s204, %s205
      %p217 = scmp.eq.s32.totalorder %s27, 1
      %p218 = por %p216, %p217
      %p220 = scmp.ne.s32.totalorder %s205, %s219
      %p221 = scmp.eq.s32.totalorder %s27, 0
      %p222 = por %p220, %p221
      %s224 = sadd.s32 %s223, 1
      %p227 = scmp.eq.s32.totalorder %s21, 1
      %p228 = scmp.ne.s32.totalorder %s223, %s225
      %p229 = scmp.eq.s32.totalorder %s21, 0
      %p230 = por %p228, %p229
      %p231 = scmp.ne.s32.totalorder %s223, %s225
      %p232 = scmp.eq.s32.totalorder %s26, 1
      %p233 = por %p231, %p232
      %p234 = scmp.ne.s32.totalorder %s225, %s226
      %p235 = scmp.eq.s32.totalorder %s26, 0
      %p236 = por %p234, %p235
      %p237 = scmp.ne.s32.totalorder %s225, %s226
      %p238 = scmp.eq.s32.totalorder %s27, 1
      %p239 = por %p237, %p238
      %p241 = scmp.ne.s32.totalorder %s226, %s240
      %p242 = scmp.eq.s32.totalorder %s27, 0
      %p243 = por %p241, %p242
      %s245 = sadd.s32 %s244, 1
      %p248 = scmp.eq.s32.totalorder %s21, 1
      %p249 = scmp.ne.s32.totalorder %s244, %s246
      %p250 = scmp.eq.s32.totalorder %s21, 0
      %p251 = por %p249, %p250
      %p252 = scmp.ne.s32.totalorder %s244, %s246
      %p253 = scmp.eq.s32.totalorder %s26, 1
      %p254 = por %p252, %p253
      %p255 = scmp.ne.s32.totalorder %s246, %s247
      %p256 = scmp.eq.s32.totalorder %s26, 0
      %p257 = por %p255, %p256
      %p258 = scmp.ne.s32.totalorder %s246, %s247
      %p259 = scmp.eq.s32.totalorder %s27, 1
      %p260 = por %p258, %p259
      %p262 = scmp.ne.s32.totalorder %s247, %s261
      %p263 = scmp.eq.s32.totalorder %s27, 0
      %p264 = por %p262, %p263
      %s266 = sadd.s32 %s265, 1
      %p269 = scmp.eq.s32.totalorder %s21, 1
      %p270 = scmp.ne.s32.totalorder %s265, %s267
      %p271 = scmp.eq.s32.totalorder %s21, 0
      %p272 = por %p270, %p271
      %p273 = scmp.ne.s32.totalorder %s265, %s267
      %p274 = scmp.eq.s32.totalorder %s26, 1
      %p275 = por %p273, %p274
      %p276 = scmp.ne.s32.totalorder %s267, %s268
      %p277 = scmp.eq.s32.totalorder %s26, 0
      %p278 = por %p276, %p277
      %p279 = scmp.ne.s32.totalorder %s267, %s268
      %p280 = scmp.eq.s32.totalorder %s27, 1
      %p281 = por %p279, %p280
      %p283 = scmp.ne.s32.totalorder %s268, %s282
      %p284 = scmp.eq.s32.totalorder %s27, 0
      %p285 = por %p283, %p284
      %s286 = ssub.s32 %s21, %s28
      %p287 = scmp.eq.s32.totalorder %s286, 0
      %s289 = sadd.s32 %s288, 1
      %s290 = scalar_select %p287, %s288, %s289
      %p293 = pneg %p287
      %p294 = scmp.eq.s32.totalorder %s21, 1
      %p295 = por %p293, %p294
      %p296 = scmp.ne.s32.totalorder %s288, %s291
      %p297 = scmp.eq.s32.totalorder %s21, 0
      %p298 = por %p296, %p297
      %p299 = scmp.ne.s32.totalorder %s288, %s291
      %p300 = scmp.eq.s32.totalorder %s26, 1
      %p301 = por %p299, %p300
      %p302 = scmp.ne.s32.totalorder %s291, %s292
      %p303 = scmp.eq.s32.totalorder %s26, 0
      %p304 = por %p302, %p303
      %p305 = scmp.ne.s32.totalorder %s291, %s292
      %p306 = scmp.eq.s32.totalorder %s27, 1
      %p307 = por %p305, %p306
      %p309 = scmp.ne.s32.totalorder %s292, %s308
      %p310 = scmp.eq.s32.totalorder %s27, 0
      %p311 = por %p309, %p310
      %p312 = scmp.le.s32.totalorder 1, %s21
      %p313 = scmp.lt.s32.totalorder %s21, 3
      %p314 = pnand %p312, %p313
      %p315 = pneg %p314
      // Predicated region
      $region9: #{tpu_custom_call.1} parent=5 // pred_check
        _
      $region10: #{tpu_custom_call.1} parent=5 // pred_check_branch
        %317 = sbr.rel (%p314) target = $region12
      $region11: #{tpu_custom_call.1} parent=5 // pred_region
        %s318 = ssub.s32 %s21, 1
        // Predicated region
        $region13: #{tpu_custom_call.1} parent=11 // pred_check
          %p319 = pneg %p68
        $region14: #{tpu_custom_call.1} parent=11 // pred_check_branch
          %321 = sbr.rel (%p319) target = $region16
        $region15: #{tpu_custom_call.1} parent=11 // pred_region
          _
        $region16: #{tpu_custom_call.1} parent=11 // pred_fallthru
          _
        // Predicated region
        $region17: #{tpu_custom_call.1} parent=11 // pred_check
          %p322 = pneg %p89
        $region18: #{tpu_custom_call.1} parent=11 // pred_check_branch
          %324 = sbr.rel (%p322) target = $region20
        $region19: #{tpu_custom_call.1} parent=11 // pred_region
          _
        $region20: #{tpu_custom_call.1} parent=11 // pred_fallthru
          _
        // Predicated region
        $region21: #{tpu_custom_call.1} parent=11 // pred_check
          %p325 = pneg %p110
        $region22: #{tpu_custom_call.1} parent=11 // pred_check_branch
          %327 = sbr.rel (%p325) target = $region24
        $region23: #{tpu_custom_call.1} parent=11 // pred_region
          _
        $region24: #{tpu_custom_call.1} parent=11 // pred_fallthru
          _
        // Predicated region
        $region25: #{tpu_custom_call.1} parent=11 // pred_check
          %p328 = pneg %p131
        $region26: #{tpu_custom_call.1} parent=11 // pred_check_branch
          %330 = sbr.rel (%p328) target = $region28
        $region27: #{tpu_custom_call.1} parent=11 // pred_region
          _
        $region28: #{tpu_custom_call.1} parent=11 // pred_fallthru
          _
        // Predicated region
        $region29: #{tpu_custom_call.1} parent=11 // pred_check
          %p331 = pneg %p152
        $region30: #{tpu_custom_call.1} parent=11 // pred_check_branch
          %333 = sbr.rel (%p331) target = $region32
        $region31: #{tpu_custom_call.1} parent=11 // pred_region
          _
        $region32: #{tpu_custom_call.1} parent=11 // pred_fallthru
          _
        // Predicated region
        $region33: #{tpu_custom_call.1} parent=11 // pred_check
          %p334 = pneg %p173
        $region34: #{tpu_custom_call.1} parent=11 // pred_check_branch
          %336 = sbr.rel (%p334) target = $region36
        $region35: #{tpu_custom_call.1} parent=11 // pred_region
          _
        $region36: #{tpu_custom_call.1} parent=11 // pred_fallthru
          _
        // Predicated region
        $region37: #{tpu_custom_call.1} parent=11 // pred_check
          %p337 = pneg %p194
        $region38: #{tpu_custom_call.1} parent=11 // pred_check_branch
          %339 = sbr.rel (%p337) target = $region40
        $region39: #{tpu_custom_call.1} parent=11 // pred_region
          _
        $region40: #{tpu_custom_call.1} parent=11 // pred_fallthru
          _
        // Predicated region
        $region41: #{tpu_custom_call.1} parent=11 // pred_check
          %p340 = pneg %p215
        $region42: #{tpu_custom_call.1} parent=11 // pred_check_branch
          %342 = sbr.rel (%p340) target = $region44
        $region43: #{tpu_custom_call.1} parent=11 // pred_region
          _
        $region44: #{tpu_custom_call.1} parent=11 // pred_fallthru
          _
        // Predicated region
        $region45: #{tpu_custom_call.1} parent=11 // pred_check
          %p343 = pneg %p236
        $region46: #{tpu_custom_call.1} parent=11 // pred_check_branch
          %345 = sbr.rel (%p343) target = $region48
        $region47: #{tpu_custom_call.1} parent=11 // pred_region
          _
        $region48: #{tpu_custom_call.1} parent=11 // pred_fallthru
          _
        // Predicated region
        $region49: #{tpu_custom_call.1} parent=11 // pred_check
          %p346 = pneg %p257
        $region50: #{tpu_custom_call.1} parent=11 // pred_check_branch
          %348 = sbr.rel (%p346) target = $region52
        $region51: #{tpu_custom_call.1} parent=11 // pred_region
          _
        $region52: #{tpu_custom_call.1} parent=11 // pred_fallthru
          _
        // Predicated region
        $region53: #{tpu_custom_call.1} parent=11 // pred_check
          %p349 = pneg %p278
        $region54: #{tpu_custom_call.1} parent=11 // pred_check_branch
          %351 = sbr.rel (%p349) target = $region56
        $region55: #{tpu_custom_call.1} parent=11 // pred_region
          _
        $region56: #{tpu_custom_call.1} parent=11 // pred_fallthru
          _
      $region12: #{tpu_custom_call.1} parent=5 // pred_fallthru
        _
      %p352 = scmp.lt.s32.totalorder %s21, 2
      // Predicated region
      $region57: #{tpu_custom_call.1} parent=5 // pred_check
        %p353 = pneg %p352
      $region58: #{tpu_custom_call.1} parent=5 // pred_check_branch
        %355 = sbr.rel (%p353) target = $region60
      $region59: #{tpu_custom_call.1} parent=5 // pred_region
        // Predicated region
        $region61: #{tpu_custom_call.1} parent=59 // pred_check
          %p356 = pneg %p41
        $region62: #{tpu_custom_call.1} parent=59 // pred_check_branch
          %358 = sbr.rel (%p356) target = $region64
        $region63: #{tpu_custom_call.1} parent=59 // pred_region
          %p359 = scmp.lt.s32.totalorder %s21, 1
          %s360 = scalar_select %p359, %s21, 1
          %s361 = smul.addr %s360, 2
          %s362 = smul.addr %s361, 4
          %s363 = scalar_lea.vmem %s0, %s362
        $region64: #{tpu_custom_call.1} parent=59 // pred_fallthru
          _
      $region60: #{tpu_custom_call.1} parent=5 // pred_fallthru
        _
      %p364 = scmp.le.s32.totalorder 1, %s21
      %p365 = scmp.lt.s32.totalorder %s21, 3
      %p366 = pnand %p364, %p365
      %p367 = pneg %p366
      // Predicated region
      $region65: #{tpu_custom_call.1} parent=5 // pred_check
        _
      $region66: #{tpu_custom_call.1} parent=5 // pred_check_branch
        %369 = sbr.rel (%p366) target = $region68
      $region67: #{tpu_custom_call.1} parent=5 // pred_region
        %s370 = ssub.s32 %s21, 1
        %p371 = scmp.lt.s32.totalorder %s26, 1
        %s372 = scalar_select %p371, %s26, 1
        %s373 = smul.addr %s372, 2
        %s374 = smul.addr %s373, 4
        %s375 = scalar_lea.vmem %s0, %s374
        %p376 = pneg %p47
        %p377 = pneg %p44
        %p378 = pneg %p68
        %p379 = pneg %p65
        %p380 = pneg %p89
        %p381 = pneg %p86
        %p382 = pneg %p110
        %p383 = pneg %p107
        %p384 = pneg %p131
        %p385 = pneg %p128
        %p386 = pneg %p152
        %p387 = pneg %p149
        %p388 = pneg %p173
        %p389 = pneg %p170
        %p390 = pneg %p194
        %p391 = pneg %p191
        %p392 = pneg %p215
        %p393 = pneg %p212
        %p394 = pneg %p236
        %p395 = pneg %p233
        %p396 = pneg %p257
        %p397 = pneg %p254
        %p398 = pneg %p278
        %p399 = pneg %p275
        %p400 = pneg %p304
        %p401 = pneg %p301
        %s402 = sand.u32 %s291, 1
        %s403 = scalar_lea.sflag [#allocation4], %s402
        %s404 = sand.u32 %s291, 1
        %s405 = smul.addr %s404, 8
        %s406 = scalar_lea.vmem [#allocation3], %s405
        %p407 = scmp.lt.s32.totalorder %s26, 1
        %s408 = scalar_select %p407, %s26, 1
        %s409 = smul.addr %s408, 2
        %s410 = smul.addr %s409, 4
        %s411 = scalar_lea.vmem %s0, %s410
        %v412 = vld [vmem:[%s411] sm:$0xff]
        %v413 = vld [vmem:[%s1] sm:$0x3]
        %v414 = vld [vmem:[%s2] sm:$0x3]
        %416 = vset.pattern.permute.xlu0 0
        %417 = vperm.xlu0 %416, %v414
        %v418 = vpop.permute.xlu0 %417
        %v421 = vcombine.high %v412, %v412
        %vm422 = vcmask 31744
        %v424 = vsel %vm422, %v413, 0
        %vm426 = vcmask 1043456
        %v427 = vsel %vm426, %v412, 0
        %v429 = vsel %vm426, %v421, 0
        %431 = vmatprep.subr.mxu0 %v429
        %432 = vmatpush1.msra.mxu0 %v427
        %433 = vmatprep.subr.mxu0 0.0
        %434 = vmatpush1.msra.mxu0 0.0
        %435 = vmatprep.subr.mxu0 0.0
        %436 = vmatpush1.msra.mxu0 0.0
        %437 = vmatprep.subr.mxu0 0.0
        %438 = vmatpush1.msra.mxu0 0.0
        %439 = vmatprep.subr.mxu0 0.0
        %440 = vmatpush1.msra.mxu0 0.0
        %441 = vmatprep.subr.mxu0 0.0
        %442 = vmatpush1.msra.mxu0 0.0
        %443 = vmatprep.subr.mxu0 0.0
        %444 = vmatpush1.msra.mxu0 0.0
        %445 = vmatprep.subr.mxu0 0.0
        %446 = vmatpush1.msra.mxu0 0.0
        %447 = vmatprep.subr.mxu0 0.0
        %448 = vmatpush1.msra.mxu0 0.0
        %449 = vmatprep.subr.mxu0 0.0
        %450 = vmatpush1.msra.mxu0 0.0
        %451 = vmatprep.subr.mxu0 0.0
        %452 = vmatpush1.msra.mxu0 0.0
        %453 = vmatprep.subr.mxu0 0.0
        %454 = vmatpush1.msra.mxu0 0.0
        %455 = vmatprep.subr.mxu0 0.0
        %456 = vmatpush1.msra.mxu0 0.0
        %457 = vmatprep.subr.mxu0 0.0
        %458 = vmatpush1.msra.mxu0 0.0
        %459 = vmatprep.subr.mxu0 0.0
        %460 = vmatpush1.msra.mxu0 0.0
        %461 = vmatprep.subr.mxu0 0.0
        %462 = vmatpush1.msra.mxu0 0.0
        %463 = vmatprep.subr.mxu0 0.0
        %464 = vmatpush1.msra.mxu0 0.0
        %465 = vmatprep.subr.mxu0 0.0
        %466 = vmatpush1.msra.mxu0 0.0
        %467 = vmatprep.subr.mxu0 0.0
        %468 = vmatpush1.msra.mxu0 0.0
        %469 = vmatprep.subr.mxu0 0.0
        %470 = vmatpush1.msra.mxu0 0.0
        %471 = vmatprep.subr.mxu0 0.0
        %472 = vmatpush1.msra.mxu0 0.0
        %473 = vmatprep.subr.mxu0 0.0
        %474 = vmatpush1.msra.mxu0 0.0
        %475 = vmatprep.subr.mxu0 0.0
        %476 = vmatpush1.msra.mxu0 0.0
        %477 = vmatprep.subr.mxu0 0.0
        %478 = vmatpush1.msra.mxu0 0.0
        %479 = vmatprep.subr.mxu0 0.0
        %480 = vmatpush1.msra.mxu0 0.0
        %481 = vmatprep.subr.mxu0 0.0
        %482 = vmatpush1.msra.mxu0 0.0
        %483 = vmatprep.subr.mxu0 0.0
        %484 = vmatpush1.msra.mxu0 0.0
        %485 = vmatprep.subr.mxu0 0.0
        %486 = vmatpush1.msra.mxu0 0.0
        %487 = vmatprep.subr.mxu0 0.0
        %488 = vmatpush1.msra.mxu0 0.0
        %489 = vmatprep.subr.mxu0 0.0
        %490 = vmatpush1.msra.mxu0 0.0
        %491 = vmatprep.subr.mxu0 0.0
        %492 = vmatpush1.msra.mxu0 0.0
        %493 = vmatprep.subr.mxu0 0.0
        %494 = vmatpush1.msra.mxu0 0.0
        %495 = vmatprep.mubr.f32.mxu0 0.0
        %496 = vmatmul.mubr.f32.gmra.mrb[0].mxu0 %v424
        %v497 = vpop.f32.mrb[0].mxu0
        %v498 = vadd.f32 %v418, %v497
        %v499 = vpop.f32.mrb[0].mxu0
        %v500 = vadd.f32 %v418, %v499
        %501 = vdwg.mxu0
        %v502 = vsub.f32 0.0, %v498
        %v503 = vsub.f32 0.0, %v500
        %v504 = vmul.f32 %v502, 1.442695
        %v505 = vpow.pop %v504
        %v506 = vmul.f32 %v503, 1.442695
        %v507 = vpow.pop %v506
        %v508 = vadd.f32 %v505, 1.0
        %v509 = vadd.f32 %v507, 1.0
        %v510 = vrcp.pop %v508
        %v511 = vmul.f32 1.0, %v510
        %v512 = vrcp.pop %v509
        %v513 = vmul.f32 1.0, %v512
        %v514 = vmul.f32 %v498, %v511
        %v515 = vmul.f32 %v500, %v513
        %v516 = vld [vmem:[%s3] sm:$0x3]
        %v517 = vld [vmem:[%s4] sm:$0x3]
        %519 = vset.pattern.permute.xlu0 0
        %520 = vperm.xlu0 %519, %v517
        %v521 = vpop.permute.xlu0 %520
        %v524 = vsel %vm422, %v516, 0
        %526 = vmatprep.subr.mxu0 %v429
        %527 = vmatpush1.msra.mxu0 %v427
        %528 = vmatprep.subr.mxu0 0.0
        %529 = vmatpush1.msra.mxu0 0.0
        %530 = vmatprep.subr.mxu0 0.0
        %531 = vmatpush1.msra.mxu0 0.0
        %532 = vmatprep.subr.mxu0 0.0
        %533 = vmatpush1.msra.mxu0 0.0
        %534 = vmatprep.subr.mxu0 0.0
        %535 = vmatpush1.msra.mxu0 0.0
        %536 = vmatprep.subr.mxu0 0.0
        %537 = vmatpush1.msra.mxu0 0.0
        %538 = vmatprep.subr.mxu0 0.0
        %539 = vmatpush1.msra.mxu0 0.0
        %540 = vmatprep.subr.mxu0 0.0
        %541 = vmatpush1.msra.mxu0 0.0
        %542 = vmatprep.subr.mxu0 0.0
        %543 = vmatpush1.msra.mxu0 0.0
        %544 = vmatprep.subr.mxu0 0.0
        %545 = vmatpush1.msra.mxu0 0.0
        %546 = vmatprep.subr.mxu0 0.0
        %547 = vmatpush1.msra.mxu0 0.0
        %548 = vmatprep.subr.mxu0 0.0
        %549 = vmatpush1.msra.mxu0 0.0
        %550 = vmatprep.subr.mxu0 0.0
        %551 = vmatpush1.msra.mxu0 0.0
        %552 = vmatprep.subr.mxu0 0.0
        %553 = vmatpush1.msra.mxu0 0.0
        %554 = vmatprep.subr.mxu0 0.0
        %555 = vmatpush1.msra.mxu0 0.0
        %556 = vmatprep.subr.mxu0 0.0
        %557 = vmatpush1.msra.mxu0 0.0
        %558 = vmatprep.subr.mxu0 0.0
        %559 = vmatpush1.msra.mxu0 0.0
        %560 = vmatprep.subr.mxu0 0.0
        %561 = vmatpush1.msra.mxu0 0.0
        %562 = vmatprep.subr.mxu0 0.0
        %563 = vmatpush1.msra.mxu0 0.0
        %564 = vmatprep.subr.mxu0 0.0
        %565 = vmatpush1.msra.mxu0 0.0
        %566 = vmatprep.subr.mxu0 0.0
        %567 = vmatpush1.msra.mxu0 0.0
        %568 = vmatprep.subr.mxu0 0.0
        %569 = vmatpush1.msra.mxu0 0.0
        %570 = vmatprep.subr.mxu0 0.0
        %571 = vmatpush1.msra.mxu0 0.0
        %572 = vmatprep.subr.mxu0 0.0
        %573 = vmatpush1.msra.mxu0 0.0
        %574 = vmatprep.subr.mxu0 0.0
        %575 = vmatpush1.msra.mxu0 0.0
        %576 = vmatprep.subr.mxu0 0.0
        %577 = vmatpush1.msra.mxu0 0.0
        %578 = vmatprep.subr.mxu0 0.0
        %579 = vmatpush1.msra.mxu0 0.0
        %580 = vmatprep.subr.mxu0 0.0
        %581 = vmatpush1.msra.mxu0 0.0
        %582 = vmatprep.subr.mxu0 0.0
        %583 = vmatpush1.msra.mxu0 0.0
        %584 = vmatprep.subr.mxu0 0.0
        %585 = vmatpush1.msra.mxu0 0.0
        %586 = vmatprep.subr.mxu0 0.0
        %587 = vmatpush1.msra.mxu0 0.0
        %588 = vmatprep.subr.mxu0 0.0
        %589 = vmatpush1.msra.mxu0 0.0
        %590 = vmatprep.mubr.f32.mxu0 0.0
        %591 = vmatmul.mubr.f32.gmra.mrb[0].mxu0 %v524
        %v592 = vpop.f32.mrb[0].mxu0
        %v593 = vadd.f32 %v521, %v592
        %v594 = vpop.f32.mrb[0].mxu0
        %v595 = vadd.f32 %v521, %v594
        %596 = vdwg.mxu0
        %v597 = vsub.f32 0.0, %v593
        %v598 = vsub.f32 0.0, %v595
        %v599 = vmul.f32 %v597, 1.442695
        %v600 = vpow.pop %v599
        %v601 = vmul.f32 %v598, 1.442695
        %v602 = vpow.pop %v601
        %v603 = vadd.f32 %v600, 1.0
        %v604 = vadd.f32 %v602, 1.0
        %v605 = vrcp.pop %v603
        %v606 = vmul.f32 1.0, %v605
        %v607 = vrcp.pop %v604
        %v608 = vmul.f32 1.0, %v607
        %v609 = vmul.f32 %v593, %v606
        %v610 = vmul.f32 %v595, %v608
        %v611 = vld [vmem:[%s5] sm:$0x3]
        %v612 = vld [vmem:[%s6] sm:$0x3]
        %614 = vset.pattern.permute.xlu0 0
        %615 = vperm.xlu0 %614, %v612
        %v616 = vpop.permute.xlu0 %615
        %vm618 = vcmask 15360
        %v620 = vsel %vm618, %v611, 0
        %vm622 = vcmask 1041408
        %v624 = vsel %vm622, %v514, 0
        %v627 = vsel %vm622, %v515, 0
        %629 = vmatprep.subr.mxu0 %v627
        %630 = vmatpush1.msra.mxu0 %v624
        %631 = vmatprep.subr.mxu0 0.0
        %632 = vmatpush1.msra.mxu0 0.0
        %633 = vmatprep.subr.mxu0 0.0
        %634 = vmatpush1.msra.mxu0 0.0
        %635 = vmatprep.subr.mxu0 0.0
        %636 = vmatpush1.msra.mxu0 0.0
        %637 = vmatprep.subr.mxu0 0.0
        %638 = vmatpush1.msra.mxu0 0.0
        %639 = vmatprep.subr.mxu0 0.0
        %640 = vmatpush1.msra.mxu0 0.0
        %641 = vmatprep.subr.mxu0 0.0
        %642 = vmatpush1.msra.mxu0 0.0
        %643 = vmatprep.subr.mxu0 0.0
        %644 = vmatpush1.msra.mxu0 0.0
        %645 = vmatprep.subr.mxu0 0.0
        %646 = vmatpush1.msra.mxu0 0.0
        %647 = vmatprep.subr.mxu0 0.0
        %648 = vmatpush1.msra.mxu0 0.0
        %649 = vmatprep.subr.mxu0 0.0
        %650 = vmatpush1.msra.mxu0 0.0
        %651 = vmatprep.subr.mxu0 0.0
        %652 = vmatpush1.msra.mxu0 0.0
        %653 = vmatprep.subr.mxu0 0.0
        %654 = vmatpush1.msra.mxu0 0.0
        %655 = vmatprep.subr.mxu0 0.0
        %656 = vmatpush1.msra.mxu0 0.0
        %657 = vmatprep.subr.mxu0 0.0
        %658 = vmatpush1.msra.mxu0 0.0
        %659 = vmatprep.subr.mxu0 0.0
        %660 = vmatpush1.msra.mxu0 0.0
        %661 = vmatprep.subr.mxu0 0.0
        %662 = vmatpush1.msra.mxu0 0.0
        %663 = vmatprep.subr.mxu0 0.0
        %664 = vmatpush1.msra.mxu0 0.0
        %665 = vmatprep.subr.mxu0 0.0
        %666 = vmatpush1.msra.mxu0 0.0
        %667 = vmatprep.subr.mxu0 0.0
        %668 = vmatpush1.msra.mxu0 0.0
        %669 = vmatprep.subr.mxu0 0.0
        %670 = vmatpush1.msra.mxu0 0.0
        %671 = vmatprep.subr.mxu0 0.0
        %672 = vmatpush1.msra.mxu0 0.0
        %673 = vmatprep.subr.mxu0 0.0
        %674 = vmatpush1.msra.mxu0 0.0
        %675 = vmatprep.subr.mxu0 0.0
        %676 = vmatpush1.msra.mxu0 0.0
        %677 = vmatprep.subr.mxu0 0.0
        %678 = vmatpush1.msra.mxu0 0.0
        %679 = vmatprep.subr.mxu0 0.0
        %680 = vmatpush1.msra.mxu0 0.0
        %681 = vmatprep.subr.mxu0 0.0
        %682 = vmatpush1.msra.mxu0 0.0
        %683 = vmatprep.subr.mxu0 0.0
        %684 = vmatpush1.msra.mxu0 0.0
        %685 = vmatprep.subr.mxu0 0.0
        %686 = vmatpush1.msra.mxu0 0.0
        %687 = vmatprep.subr.mxu0 0.0
        %688 = vmatpush1.msra.mxu0 0.0
        %689 = vmatprep.subr.mxu0 0.0
        %690 = vmatpush1.msra.mxu0 0.0
        %691 = vmatprep.subr.mxu0 0.0
        %692 = vmatpush1.msra.mxu0 0.0
        %693 = vmatprep.mubr.f32.mxu0 0.0
        %694 = vmatmul.mubr.f32.gmra.mrb[0].mxu0 %v620
        %v695 = vpop.f32.mrb[0].mxu0
        %v696 = vadd.f32 %v616, %v695
        %v697 = vpop.f32.mrb[0].mxu0
        %v698 = vadd.f32 %v616, %v697
        %699 = vdwg.mxu0
        %v700 = vsub.f32 0.0, %v696
        %v701 = vsub.f32 0.0, %v698
        %v702 = vmul.f32 %v700, 1.442695
        %v703 = vpow.pop %v702
        %v704 = vmul.f32 %v701, 1.442695
        %v705 = vpow.pop %v704
        %v706 = vadd.f32 %v703, 1.0
        %v707 = vadd.f32 %v705, 1.0
        %v708 = vrcp.pop %v706
        %v709 = vmul.f32 1.0, %v708
        %v710 = vrcp.pop %v707
        %v711 = vmul.f32 1.0, %v710
        %v712 = vmul.f32 %v696, %v709
        %v713 = vmul.f32 %v698, %v711
        %vm714 = vcmask 1043458
        %vm715 = vmor %vm714, %vm622
        %vm716 = vcmask 275460
        %vm717 = vmor %vm716, %vm715
        %718 = vst.msk [vmem:[#allocation2] sm:$0x3f] %vm717, 0.0
        %v721 = vcombine.low %v712, %v713
        %v723 = vunpack.c.l.s4 1983009808
        %v724 = vunpack.c.0.s8 %v723
        %v725 = vlaneseq
        %v726 = vshrl.u32 %v725, 7
        %v727 = vsub.s32 %v724, %v726
        %v728 = vrot.slane %v721, %v727
        %729 = vrot.lane.b32.xlu0 %v728, 17
        %v730 = vpop.permute.xlu0 %729
        %v731 = vrot.slane %v730, 6
        %vm732 = vcmask 138240
        %v733 = vsel %vm732, %v731, %v730
        %vm735 = vcmask 1041544
        %vm736 = vmor %vm714, %vm735
        %vm737 = vcmask 136196
        %vm738 = vmor %vm737, %vm736
        %739 = vst.msk [vmem:[#allocation2] sm:$0x3f] %vm738, %v733
        %v740 = vlaneseq
        %v741 = vand.u32 %v740, 127
        %v742 = vadd.s32 %v741, 128
        %vm743 = vcmp.lt.s32.totalorder %v741, 0
        %v744 = vsub.s32 0, %v741
        %v745 = vsel %vm743, %v744, %v741
        %v746 = vshrl.u32 %v745, 4
        %v747 = vand.u32 %v745, 15
        %v748 = vsub.s32 0, %v747
        %v749 = vsel %vm743, %v748, %v747
        %vm750 = vcmp.lt.s32.totalorder %v742, 0
        %v751 = vsub.s32 0, %v742
        %v752 = vsel %vm750, %v751, %v742
        %v753 = vshrl.u32 %v752, 4
        %v754 = vand.u32 %v752, 15
        %v755 = vsub.s32 0, %v754
        %v756 = vsel %vm750, %v755, %v754
        %vm757 = vcmp.ne.s32.totalorder %v749, 0
        %vm758 = vcmp.ne.s32.totalorder %v756, 0
        %vm759 = vcmp.lt.s32.totalorder %v749, 0
        %vm760 = vcmp.lt.s32.totalorder %v756, 0
        %vm761 = vmand %vm759, %vm757
        %vm762 = vmand %vm760, %vm758
        %v763 = vadd.s32 %v749, 16
        %v764 = vadd.s32 %v756, 16
        %v765 = vsel %vm761, %v763, %v749
        %v766 = vsel %vm762, %v764, %v756
        %vm767 = vcmp.ge.s32.totalorder %v765, 1
        %vm768 = vcmp.ge.s32.totalorder %v766, 1
        %vm769 = vcmp.le.s32.totalorder %v765, 14
        %vm770 = vcmp.le.s32.totalorder %v766, 14
        %v771 = vld [vmem:[#allocation2] sm:$0xf]
        %v772 = vsel %vm767, 1, 0
        %v773 = vsel %vm768, 1, 0
        %vm774 = vcmp.eq.s32.totalorder %v772, 1
        %vm775 = vcmp.eq.s32.totalorder %v773, 1
        %v778 = vunpack.c.l.s4 1983009808
        %v779 = vunpack.c.0.s8 %v778
        %v780 = vlaneseq
        %v781 = vshrl.u32 %v780, 7
        %v782 = vsub.s32 %v779, %v781
        %v783 = vrot.slane %v771, %v782
        %v784 = vcombine.high %v783, %v783
        %v787 = vsel %vm774, %v783, 0.0
        %v788 = vsel %vm775, %v784, 0.0
        %v789 = vld [vmem:[%s7] sm:$0x3]
        %v790 = vld [vmem:[#allocation2] sm:$0x3f]
        %s791 = scalar_lea.vmem %s7, 2
        %v792 = vld [vmem:[%s791] sm:$0x3]
        %v794 = vcombine.high %v790, %v790
        %v796 = vunpack.c.l.s4 1983009808
        %v797 = vunpack.c.0.s8 %v796
        %v798 = vlaneseq
        %v799 = vshrl.u32 %v798, 7
        %v800 = vsub.s32 %v797, %v799
        %v801 = vrot.slane %v790, %v800
        %v803 = vunpack.c.l.s4 1983009808
        %v804 = vunpack.c.0.s8 %v803
        %v805 = vlaneseq
        %v806 = vshrl.u32 %v805, 7
        %v807 = vsub.s32 %v804, %v806
        %v808 = vrot.slane %v794, %v807
        %v809 = vcombine.high %v801, %v801
        %810 = vrot.lane.b32.xlu0 %v801, 127
        %v811 = vpop.permute.xlu0 %810
        %812 = vrot.lane.b32.xlu0 %v809, 127
        %v813 = vpop.permute.xlu0 %812
        %814 = vrot.lane.b32.xlu0 %v808, 127
        %v815 = vpop.permute.xlu0 %814
        %vm816 = vcmask 1039360
        %v817 = vsel %vm816, %v811, %v813
        %v818 = vsel %vm816, %v813, %v815
        %v820 = vsel %vm618, %v792, 0
        %v822 = vsel %vm622, %v817, 0
        %v824 = vsel %vm622, %v818, 0
        %826 = vmatprep.subr.mxu0 %v824
        %827 = vmatpush1.msra.mxu0 %v822
        %828 = vmatprep.subr.mxu0 0.0
        %829 = vmatpush1.msra.mxu0 0.0
        %830 = vmatprep.subr.mxu0 0.0
        %831 = vmatpush1.msra.mxu0 0.0
        %832 = vmatprep.subr.mxu0 0.0
        %833 = vmatpush1.msra.mxu0 0.0
        %834 = vmatprep.subr.mxu0 0.0
        %835 = vmatpush1.msra.mxu0 0.0
        %836 = vmatprep.subr.mxu0 0.0
        %837 = vmatpush1.msra.mxu0 0.0
        %838 = vmatprep.subr.mxu0 0.0
        %839 = vmatpush1.msra.mxu0 0.0
        %840 = vmatprep.subr.mxu0 0.0
        %841 = vmatpush1.msra.mxu0 0.0
        %842 = vmatprep.subr.mxu0 0.0
        %843 = vmatpush1.msra.mxu0 0.0
        %844 = vmatprep.subr.mxu0 0.0
        %845 = vmatpush1.msra.mxu0 0.0
        %846 = vmatprep.subr.mxu0 0.0
        %847 = vmatpush1.msra.mxu0 0.0
        %848 = vmatprep.subr.mxu0 0.0
        %849 = vmatpush1.msra.mxu0 0.0
        %850 = vmatprep.subr.mxu0 0.0
        %851 = vmatpush1.msra.mxu0 0.0
        %852 = vmatprep.subr.mxu0 0.0
        %853 = vmatpush1.msra.mxu0 0.0
        %854 = vmatprep.subr.mxu0 0.0
        %855 = vmatpush1.msra.mxu0 0.0
        %856 = vmatprep.subr.mxu0 0.0
        %857 = vmatpush1.msra.mxu0 0.0
        %858 = vmatprep.subr.mxu0 0.0
        %859 = vmatpush1.msra.mxu0 0.0
        %860 = vmatprep.subr.mxu0 0.0
        %861 = vmatpush1.msra.mxu0 0.0
        %862 = vmatprep.subr.mxu0 0.0
        %863 = vmatpush1.msra.mxu0 0.0
        %864 = vmatprep.subr.mxu0 0.0
        %865 = vmatpush1.msra.mxu0 0.0
        %866 = vmatprep.subr.mxu0 0.0
        %867 = vmatpush1.msra.mxu0 0.0
        %868 = vmatprep.subr.mxu0 0.0
        %869 = vmatpush1.msra.mxu0 0.0
        %870 = vmatprep.subr.mxu0 0.0
        %871 = vmatpush1.msra.mxu0 0.0
        %872 = vmatprep.subr.mxu0 0.0
        %873 = vmatpush1.msra.mxu0 0.0
        %874 = vmatprep.subr.mxu0 0.0
        %875 = vmatpush1.msra.mxu0 0.0
        %876 = vmatprep.subr.mxu0 0.0
        %877 = vmatpush1.msra.mxu0 0.0
        %878 = vmatprep.subr.mxu0 0.0
        %879 = vmatpush1.msra.mxu0 0.0
        %880 = vmatprep.subr.mxu0 0.0
        %881 = vmatpush1.msra.mxu0 0.0
        %882 = vmatprep.subr.mxu0 0.0
        %883 = vmatpush1.msra.mxu0 0.0
        %884 = vmatprep.subr.mxu0 0.0
        %885 = vmatpush1.msra.mxu0 0.0
        %886 = vmatprep.subr.mxu0 0.0
        %887 = vmatpush1.msra.mxu0 0.0
        %888 = vmatprep.subr.mxu0 0.0
        %889 = vmatpush1.msra.mxu0 0.0
        %890 = vmatprep.mubr.f32.mxu0 0.0
        %891 = vmatmul.mubr.f32.gmra.mrb[0].mxu0 %v820
        %v892 = vpop.f32.mrb[0].mxu0
        %v893 = vadd.f32 0.0, %v892
        %v894 = vpop.f32.mrb[0].mxu0
        %v895 = vadd.f32 0.0, %v894
        %896 = vdwg.mxu0
        %v898 = vsel %vm618, %v789, 0
        %v901 = vsel %vm622, %v787, 0
        %v904 = vsel %vm622, %v788, 0
        %906 = vmatprep.subr.mxu0 %v904
        %907 = vmatpush1.msra.mxu0 %v901
        %908 = vmatprep.subr.mxu0 0.0
        %909 = vmatpush1.msra.mxu0 0.0
        %910 = vmatprep.subr.mxu0 0.0
        %911 = vmatpush1.msra.mxu0 0.0
        %912 = vmatprep.subr.mxu0 0.0
        %913 = vmatpush1.msra.mxu0 0.0
        %914 = vmatprep.subr.mxu0 0.0
        %915 = vmatpush1.msra.mxu0 0.0
        %916 = vmatprep.subr.mxu0 0.0
        %917 = vmatpush1.msra.mxu0 0.0
        %918 = vmatprep.subr.mxu0 0.0
        %919 = vmatpush1.msra.mxu0 0.0
        %920 = vmatprep.subr.mxu0 0.0
        %921 = vmatpush1.msra.mxu0 0.0
        %922 = vmatprep.subr.mxu0 0.0
        %923 = vmatpush1.msra.mxu0 0.0
        %924 = vmatprep.subr.mxu0 0.0
        %925 = vmatpush1.msra.mxu0 0.0
        %926 = vmatprep.subr.mxu0 0.0
        %927 = vmatpush1.msra.mxu0 0.0
        %928 = vmatprep.subr.mxu0 0.0
        %929 = vmatpush1.msra.mxu0 0.0
        %930 = vmatprep.subr.mxu0 0.0
        %931 = vmatpush1.msra.mxu0 0.0
        %932 = vmatprep.subr.mxu0 0.0
        %933 = vmatpush1.msra.mxu0 0.0
        %934 = vmatprep.subr.mxu0 0.0
        %935 = vmatpush1.msra.mxu0 0.0
        %936 = vmatprep.subr.mxu0 0.0
        %937 = vmatpush1.msra.mxu0 0.0
        %938 = vmatprep.subr.mxu0 0.0
        %939 = vmatpush1.msra.mxu0 0.0
        %940 = vmatprep.subr.mxu0 0.0
        %941 = vmatpush1.msra.mxu0 0.0
        %942 = vmatprep.subr.mxu0 0.0
        %943 = vmatpush1.msra.mxu0 0.0
        %944 = vmatprep.subr.mxu0 0.0
        %945 = vmatpush1.msra.mxu0 0.0
        %946 = vmatprep.subr.mxu0 0.0
        %947 = vmatpush1.msra.mxu0 0.0
        %948 = vmatprep.subr.mxu0 0.0
        %949 = vmatpush1.msra.mxu0 0.0
        %950 = vmatprep.subr.mxu0 0.0
        %951 = vmatpush1.msra.mxu0 0.0
        %952 = vmatprep.subr.mxu0 0.0
        %953 = vmatpush1.msra.mxu0 0.0
        %954 = vmatprep.subr.mxu0 0.0
        %955 = vmatpush1.msra.mxu0 0.0
        %956 = vmatprep.subr.mxu0 0.0
        %957 = vmatpush1.msra.mxu0 0.0
        %958 = vmatprep.subr.mxu0 0.0
        %959 = vmatpush1.msra.mxu0 0.0
        %960 = vmatprep.subr.mxu0 0.0
        %961 = vmatpush1.msra.mxu0 0.0
        %962 = vmatprep.subr.mxu0 0.0
        %963 = vmatpush1.msra.mxu0 0.0
        %964 = vmatprep.subr.mxu0 0.0
        %965 = vmatpush1.msra.mxu0 0.0
        %966 = vmatprep.subr.mxu0 0.0
        %967 = vmatpush1.msra.mxu0 0.0
        %968 = vmatprep.subr.mxu0 0.0
        %969 = vmatpush1.msra.mxu0 0.0
        %970 = vmatprep.mubr.f32.mxu0 0.0
        %971 = vmatmul.mubr.f32.gmra.mrb[0].mxu0 %v898
        %v972 = vpop.f32.mrb[0].mxu0
        %v973 = vadd.f32 %v893, %v972
        %v974 = vpop.f32.mrb[0].mxu0
        %v975 = vadd.f32 %v895, %v974
        %976 = vdwg.mxu0
        %v977 = vld [vmem:[#allocation2] sm:$0x3f]
        %v978 = vsel %vm769, 1, 0
        %v979 = vsel %vm770, 1, 0
        %vm980 = vcmp.eq.s32.totalorder %v978, 1
        %vm981 = vcmp.eq.s32.totalorder %v979, 1
        %v983 = vcombine.high %v977, %v977
        %v985 = vunpack.c.l.s4 1983009808
        %v986 = vunpack.c.0.s8 %v985
        %v987 = vlaneseq
        %v988 = vshrl.u32 %v987, 7
        %v989 = vsub.s32 %v986, %v988
        %v990 = vrot.slane %v977, %v989
        %v992 = vunpack.c.l.s4 1983009808
        %v993 = vunpack.c.0.s8 %v992
        %v994 = vlaneseq
        %v995 = vshrl.u32 %v994, 7
        %v996 = vsub.s32 %v993, %v995
        %v997 = vrot.slane %v983, %v996
        %v998 = vcombine.high %v990, %v990
        %999 = vrot.lane.b32.xlu0 %v990, 126
        %v1000 = vpop.permute.xlu0 %999
        %1001 = vrot.lane.b32.xlu0 %v998, 126
        %v1002 = vpop.permute.xlu0 %1001
        %1003 = vrot.lane.b32.xlu0 %v997, 126
        %v1004 = vpop.permute.xlu0 %1003
        %vm1005 = vcmask 1031168
        %v1006 = vsel %vm1005, %v1000, %v1002
        %v1007 = vsel %vm1005, %v1002, %v1004
        %v1010 = vsel %vm980, %v1006, 0.0
        %v1011 = vsel %vm981, %v1007, 0.0
        %s1012 = scalar_lea.vmem %s7, 4
        %v1013 = vld [vmem:[%s1012] sm:$0x3]
        %v1015 = vsel %vm618, %v1013, 0
        %v1018 = vsel %vm622, %v1010, 0
        %v1021 = vsel %vm622, %v1011, 0
        %1023 = vmatprep.subr.mxu0 %v1021
        %1024 = vmatpush1.msra.mxu0 %v1018
        %1025 = vmatprep.subr.mxu0 0.0
        %1026 = vmatpush1.msra.mxu0 0.0
        %1027 = vmatprep.subr.mxu0 0.0
        %1028 = vmatpush1.msra.mxu0 0.0
        %1029 = vmatprep.subr.mxu0 0.0
        %1030 = vmatpush1.msra.mxu0 0.0
        %1031 = vmatprep.subr.mxu0 0.0
        %1032 = vmatpush1.msra.mxu0 0.0
        %1033 = vmatprep.subr.mxu0 0.0
        %1034 = vmatpush1.msra.mxu0 0.0
        %1035 = vmatprep.subr.mxu0 0.0
        %1036 = vmatpush1.msra.mxu0 0.0
        %1037 = vmatprep.subr.mxu0 0.0
        %1038 = vmatpush1.msra.mxu0 0.0
        %1039 = vmatprep.subr.mxu0 0.0
        %1040 = vmatpush1.msra.mxu0 0.0
        %1041 = vmatprep.subr.mxu0 0.0
        %1042 = vmatpush1.msra.mxu0 0.0
        %1043 = vmatprep.subr.mxu0 0.0
        %1044 = vmatpush1.msra.mxu0 0.0
        %1045 = vmatprep.subr.mxu0 0.0
        %1046 = vmatpush1.msra.mxu0 0.0
        %1047 = vmatprep.subr.mxu0 0.0
        %1048 = vmatpush1.msra.mxu0 0.0
        %1049 = vmatprep.subr.mxu0 0.0
        %1050 = vmatpush1.msra.mxu0 0.0
        %1051 = vmatprep.subr.mxu0 0.0
        %1052 = vmatpush1.msra.mxu0 0.0
        %1053 = vmatprep.subr.mxu0 0.0
        %1054 = vmatpush1.msra.mxu0 0.0
        %1055 = vmatprep.subr.mxu0 0.0
        %1056 = vmatpush1.msra.mxu0 0.0
        %1057 = vmatprep.subr.mxu0 0.0
        %1058 = vmatpush1.msra.mxu0 0.0
        %1059 = vmatprep.subr.mxu0 0.0
        %1060 = vmatpush1.msra.mxu0 0.0
        %1061 = vmatprep.subr.mxu0 0.0
        %1062 = vmatpush1.msra.mxu0 0.0
        %1063 = vmatprep.subr.mxu0 0.0
        %1064 = vmatpush1.msra.mxu0 0.0
        %1065 = vmatprep.subr.mxu0 0.0
        %1066 = vmatpush1.msra.mxu0 0.0
        %1067 = vmatprep.subr.mxu0 0.0
        %1068 = vmatpush1.msra.mxu0 0.0
        %1069 = vmatprep.subr.mxu0 0.0
        %1070 = vmatpush1.msra.mxu0 0.0
        %1071 = vmatprep.subr.mxu0 0.0
        %1072 = vmatpush1.msra.mxu0 0.0
        %1073 = vmatprep.subr.mxu0 0.0
        %1074 = vmatpush1.msra.mxu0 0.0
        %1075 = vmatprep.subr.mxu0 0.0
        %1076 = vmatpush1.msra.mxu0 0.0
        %1077 = vmatprep.subr.mxu0 0.0
        %1078 = vmatpush1.msra.mxu0 0.0
        %1079 = vmatprep.subr.mxu0 0.0
        %1080 = vmatpush1.msra.mxu0 0.0
        %1081 = vmatprep.subr.mxu0 0.0
        %1082 = vmatpush1.msra.mxu0 0.0
        %1083 = vmatprep.subr.mxu0 0.0
        %1084 = vmatpush1.msra.mxu0 0.0
        %1085 = vmatprep.subr.mxu0 0.0
        %1086 = vmatpush1.msra.mxu0 0.0
        %1087 = vmatprep.mubr.f32.mxu0 0.0
        %1088 = vmatmul.mubr.f32.gmra.mrb[0].mxu0 %v1015
        %v1089 = vpop.f32.mrb[0].mxu0
        %v1090 = vadd.f32 0.0, %v1089
        %v1091 = vpop.f32.mrb[0].mxu0
        %v1092 = vadd.f32 0.0, %v1091
        %1093 = vdwg.mxu0
        %v1094 = vadd.f32 %v973, %v1090
        %v1095 = vadd.f32 %v975, %v1092
        %v1096 = vld [vmem:[#allocation2] sm:$0x3f]
        %v1098 = vcombine.high %v1096, %v1096
        %v1100 = vunpack.c.l.s4 1983009808
        %v1101 = vunpack.c.0.s8 %v1100
        %v1102 = vlaneseq
        %v1103 = vshrl.u32 %v1102, 7
        %v1104 = vsub.s32 %v1101, %v1103
        %v1105 = vrot.slane %v1096, %v1104
        %v1107 = vunpack.c.l.s4 1983009808
        %v1108 = vunpack.c.0.s8 %v1107
        %v1109 = vlaneseq
        %v1110 = vshrl.u32 %v1109, 7
        %v1111 = vsub.s32 %v1108, %v1110
        %v1112 = vrot.slane %v1098, %v1111
        %v1113 = vcombine.high %v1105, %v1105
        %1114 = vrot.lane.b32.xlu0 %v1105, 112
        %v1115 = vpop.permute.xlu0 %1114
        %1116 = vrot.lane.b32.xlu0 %v1113, 112
        %v1117 = vpop.permute.xlu0 %1116
        %1118 = vrot.lane.b32.xlu0 %v1112, 112
        %v1119 = vpop.permute.xlu0 %1118
        %vm1120 = vcmask 916480
        %v1121 = vsel %vm1120, %v1115, %v1117
        %v1122 = vsel %vm1120, %v1117, %v1119
        %v1125 = vsel %vm774, %v1121, 0.0
        %v1126 = vsel %vm775, %v1122, 0.0
        %s1127 = scalar_lea.vmem %s7, 6
        %v1128 = vld [vmem:[%s1127] sm:$0x3]
        %v1130 = vsel %vm618, %v1128, 0
        %v1133 = vsel %vm622, %v1125, 0
        %v1136 = vsel %vm622, %v1126, 0
        %1138 = vmatprep.subr.mxu0 %v1136
        %1139 = vmatpush1.msra.mxu0 %v1133
        %1140 = vmatprep.subr.mxu0 0.0
        %1141 = vmatpush1.msra.mxu0 0.0
        %1142 = vmatprep.subr.mxu0 0.0
        %1143 = vmatpush1.msra.mxu0 0.0
        %1144 = vmatprep.subr.mxu0 0.0
        %1145 = vmatpush1.msra.mxu0 0.0
        %1146 = vmatprep.subr.mxu0 0.0
        %1147 = vmatpush1.msra.mxu0 0.0
        %1148 = vmatprep.subr.mxu0 0.0
        %1149 = vmatpush1.msra.mxu0 0.0
        %1150 = vmatprep.subr.mxu0 0.0
        %1151 = vmatpush1.msra.mxu0 0.0
        %1152 = vmatprep.subr.mxu0 0.0
        %1153 = vmatpush1.msra.mxu0 0.0
        %1154 = vmatprep.subr.mxu0 0.0
        %1155 = vmatpush1.msra.mxu0 0.0
        %1156 = vmatprep.subr.mxu0 0.0
        %1157 = vmatpush1.msra.mxu0 0.0
        %1158 = vmatprep.subr.mxu0 0.0
        %1159 = vmatpush1.msra.mxu0 0.0
        %1160 = vmatprep.subr.mxu0 0.0
        %1161 = vmatpush1.msra.mxu0 0.0
        %1162 = vmatprep.subr.mxu0 0.0
        %1163 = vmatpush1.msra.mxu0 0.0
        %1164 = vmatprep.subr.mxu0 0.0
        %1165 = vmatpush1.msra.mxu0 0.0
        %1166 = vmatprep.subr.mxu0 0.0
        %1167 = vmatpush1.msra.mxu0 0.0
        %1168 = vmatprep.subr.mxu0 0.0
        %1169 = vmatpush1.msra.mxu0 0.0
        %1170 = vmatprep.subr.mxu0 0.0
        %1171 = vmatpush1.msra.mxu0 0.0
        %1172 = vmatprep.subr.mxu0 0.0
        %1173 = vmatpush1.msra.mxu0 0.0
        %1174 = vmatprep.subr.mxu0 0.0
        %1175 = vmatpush1.msra.mxu0 0.0
        %1176 = vmatprep.subr.mxu0 0.0
        %1177 = vmatpush1.msra.mxu0 0.0
        %1178 = vmatprep.subr.mxu0 0.0
        %1179 = vmatpush1.msra.mxu0 0.0
        %1180 = vmatprep.subr.mxu0 0.0
        %1181 = vmatpush1.msra.mxu0 0.0
        %1182 = vmatprep.subr.mxu0 0.0
        %1183 = vmatpush1.msra.mxu0 0.0
        %1184 = vmatprep.subr.mxu0 0.0
        %1185 = vmatpush1.msra.mxu0 0.0
        %1186 = vmatprep.subr.mxu0 0.0
        %1187 = vmatpush1.msra.mxu0 0.0
        %1188 = vmatprep.subr.mxu0 0.0
        %1189 = vmatpush1.msra.mxu0 0.0
        %1190 = vmatprep.subr.mxu0 0.0
        %1191 = vmatpush1.msra.mxu0 0.0
        %1192 = vmatprep.subr.mxu0 0.0
        %1193 = vmatpush1.msra.mxu0 0.0
        %1194 = vmatprep.subr.mxu0 0.0
        %1195 = vmatpush1.msra.mxu0 0.0
        %1196 = vmatprep.subr.mxu0 0.0
        %1197 = vmatpush1.msra.mxu0 0.0
        %1198 = vmatprep.subr.mxu0 0.0
        %1199 = vmatpush1.msra.mxu0 0.0
        %1200 = vmatprep.subr.mxu0 0.0
        %1201 = vmatpush1.msra.mxu0 0.0
        %1202 = vmatprep.mubr.f32.mxu0 0.0
        %1203 = vmatmul.mubr.f32.gmra.mrb[0].mxu0 %v1130
        %v1204 = vpop.f32.mrb[0].mxu0
        %v1205 = vadd.f32 0.0, %v1204
        %v1206 = vpop.f32.mrb[0].mxu0
        %v1207 = vadd.f32 0.0, %v1206
        %1208 = vdwg.mxu0
        %v1209 = vadd.f32 %v1094, %v1205
        %v1210 = vadd.f32 %v1095, %v1207
        %v1211 = vld [vmem:[#allocation2] sm:$0x3f]
        %s1212 = scalar_lea.vmem %s7, 8
        %v1213 = vld [vmem:[%s1212] sm:$0x3]
        %v1215 = vcombine.high %v1211, %v1211
        %v1217 = vunpack.c.l.s4 1983009808
        %v1218 = vunpack.c.0.s8 %v1217
        %v1219 = vlaneseq
        %v1220 = vshrl.u32 %v1219, 7
        %v1221 = vsub.s32 %v1218, %v1220
        %v1222 = vrot.slane %v1211, %v1221
        %v1224 = vunpack.c.l.s4 1983009808
        %v1225 = vunpack.c.0.s8 %v1224
        %v1226 = vlaneseq
        %v1227 = vshrl.u32 %v1226, 7
        %v1228 = vsub.s32 %v1225, %v1227
        %v1229 = vrot.slane %v1215, %v1228
        %v1230 = vcombine.high %v1222, %v1222
        %1231 = vrot.lane.b32.xlu0 %v1222, 111
        %v1232 = vpop.permute.xlu0 %1231
        %1233 = vrot.lane.b32.xlu0 %v1230, 111
        %v1234 = vpop.permute.xlu0 %1233
        %1235 = vrot.lane.b32.xlu0 %v1229, 111
        %v1236 = vpop.permute.xlu0 %1235
        %vm1237 = vcmask 908288
        %v1238 = vsel %vm1237, %v1232, %v1234
        %v1239 = vsel %vm1237, %v1234, %v1236
        %v1241 = vsel %vm618, %v1213, 0
        %v1243 = vsel %vm622, %v1238, 0
        %v1245 = vsel %vm622, %v1239, 0
        %1247 = vmatprep.subr.mxu0 %v1245
        %1248 = vmatpush1.msra.mxu0 %v1243
        %1249 = vmatprep.subr.mxu0 0.0
        %1250 = vmatpush1.msra.mxu0 0.0
        %1251 = vmatprep.subr.mxu0 0.0
        %1252 = vmatpush1.msra.mxu0 0.0
        %1253 = vmatprep.subr.mxu0 0.0
        %1254 = vmatpush1.msra.mxu0 0.0
        %1255 = vmatprep.subr.mxu0 0.0
        %1256 = vmatpush1.msra.mxu0 0.0
        %1257 = vmatprep.subr.mxu0 0.0
        %1258 = vmatpush1.msra.mxu0 0.0
        %1259 = vmatprep.subr.mxu0 0.0
        %1260 = vmatpush1.msra.mxu0 0.0
        %1261 = vmatprep.subr.mxu0 0.0
        %1262 = vmatpush1.msra.mxu0 0.0
        %1263 = vmatprep.subr.mxu0 0.0
        %1264 = vmatpush1.msra.mxu0 0.0
        %1265 = vmatprep.subr.mxu0 0.0
        %1266 = vmatpush1.msra.mxu0 0.0
        %1267 = vmatprep.subr.mxu0 0.0
        %1268 = vmatpush1.msra.mxu0 0.0
        %1269 = vmatprep.subr.mxu0 0.0
        %1270 = vmatpush1.msra.mxu0 0.0
        %1271 = vmatprep.subr.mxu0 0.0
        %1272 = vmatpush1.msra.mxu0 0.0
        %1273 = vmatprep.subr.mxu0 0.0
        %1274 = vmatpush1.msra.mxu0 0.0
        %1275 = vmatprep.subr.mxu0 0.0
        %1276 = vmatpush1.msra.mxu0 0.0
        %1277 = vmatprep.subr.mxu0 0.0
        %1278 = vmatpush1.msra.mxu0 0.0
        %1279 = vmatprep.subr.mxu0 0.0
        %1280 = vmatpush1.msra.mxu0 0.0
        %1281 = vmatprep.subr.mxu0 0.0
        %1282 = vmatpush1.msra.mxu0 0.0
        %1283 = vmatprep.subr.mxu0 0.0
        %1284 = vmatpush1.msra.mxu0 0.0
        %1285 = vmatprep.subr.mxu0 0.0
        %1286 = vmatpush1.msra.mxu0 0.0
        %1287 = vmatprep.subr.mxu0 0.0
        %1288 = vmatpush1.msra.mxu0 0.0
        %1289 = vmatprep.subr.mxu0 0.0
        %1290 = vmatpush1.msra.mxu0 0.0
        %1291 = vmatprep.subr.mxu0 0.0
        %1292 = vmatpush1.msra.mxu0 0.0
        %1293 = vmatprep.subr.mxu0 0.0
        %1294 = vmatpush1.msra.mxu0 0.0
        %1295 = vmatprep.subr.mxu0 0.0
        %1296 = vmatpush1.msra.mxu0 0.0
        %1297 = vmatprep.subr.mxu0 0.0
        %1298 = vmatpush1.msra.mxu0 0.0
        %1299 = vmatprep.subr.mxu0 0.0
        %1300 = vmatpush1.msra.mxu0 0.0
        %1301 = vmatprep.subr.mxu0 0.0
        %1302 = vmatpush1.msra.mxu0 0.0
        %1303 = vmatprep.subr.mxu0 0.0
        %1304 = vmatpush1.msra.mxu0 0.0
        %1305 = vmatprep.subr.mxu0 0.0
        %1306 = vmatpush1.msra.mxu0 0.0
        %1307 = vmatprep.subr.mxu0 0.0
        %1308 = vmatpush1.msra.mxu0 0.0
        %1309 = vmatprep.subr.mxu0 0.0
        %1310 = vmatpush1.msra.mxu0 0.0
        %1311 = vmatprep.mubr.f32.mxu0 0.0
        %1312 = vmatmul.mubr.f32.gmra.mrb[0].mxu0 %v1241
        %v1313 = vpop.f32.mrb[0].mxu0
        %v1314 = vadd.f32 0.0, %v1313
        %v1315 = vpop.f32.mrb[0].mxu0
        %v1316 = vadd.f32 0.0, %v1315
        %1317 = vdwg.mxu0
        %v1318 = vadd.f32 %v1209, %v1314
        %v1319 = vadd.f32 %v1210, %v1316
        %v1320 = vld [vmem:[#allocation2] sm:$0x3f]
        %v1322 = vcombine.high %v1320, %v1320
        %v1324 = vunpack.c.l.s4 1983009808
        %v1325 = vunpack.c.0.s8 %v1324
        %v1326 = vlaneseq
        %v1327 = vshrl.u32 %v1326, 7
        %v1328 = vsub.s32 %v1325, %v1327
        %v1329 = vrot.slane %v1320, %v1328
        %v1331 = vunpack.c.l.s4 1983009808
        %v1332 = vunpack.c.0.s8 %v1331
        %v1333 = vlaneseq
        %v1334 = vshrl.u32 %v1333, 7
        %v1335 = vsub.s32 %v1332, %v1334
        %v1336 = vrot.slane %v1322, %v1335
        %v1337 = vcombine.high %v1329, %v1329
        %1338 = vrot.lane.b32.xlu0 %v1329, 110
        %v1339 = vpop.permute.xlu0 %1338
        %1340 = vrot.lane.b32.xlu0 %v1337, 110
        %v1341 = vpop.permute.xlu0 %1340
        %1342 = vrot.lane.b32.xlu0 %v1336, 110
        %v1343 = vpop.permute.xlu0 %1342
        %vm1344 = vcmask 900096
        %v1345 = vsel %vm1344, %v1339, %v1341
        %v1346 = vsel %vm1344, %v1341, %v1343
        %v1349 = vsel %vm980, %v1345, 0.0
        %v1350 = vsel %vm981, %v1346, 0.0
        %s1351 = scalar_lea.vmem %s7, 10
        %v1352 = vld [vmem:[%s1351] sm:$0x3]
        %v1354 = vsel %vm618, %v1352, 0
        %v1357 = vsel %vm622, %v1349, 0
        %v1360 = vsel %vm622, %v1350, 0
        %1362 = vmatprep.subr.mxu0 %v1360
        %1363 = vmatpush1.msra.mxu0 %v1357
        %1364 = vmatprep.subr.mxu0 0.0
        %1365 = vmatpush1.msra.mxu0 0.0
        %1366 = vmatprep.subr.mxu0 0.0
        %1367 = vmatpush1.msra.mxu0 0.0
        %1368 = vmatprep.subr.mxu0 0.0
        %1369 = vmatpush1.msra.mxu0 0.0
        %1370 = vmatprep.subr.mxu0 0.0
        %1371 = vmatpush1.msra.mxu0 0.0
        %1372 = vmatprep.subr.mxu0 0.0
        %1373 = vmatpush1.msra.mxu0 0.0
        %1374 = vmatprep.subr.mxu0 0.0
        %1375 = vmatpush1.msra.mxu0 0.0
        %1376 = vmatprep.subr.mxu0 0.0
        %1377 = vmatpush1.msra.mxu0 0.0
        %1378 = vmatprep.subr.mxu0 0.0
        %1379 = vmatpush1.msra.mxu0 0.0
        %1380 = vmatprep.subr.mxu0 0.0
        %1381 = vmatpush1.msra.mxu0 0.0
        %1382 = vmatprep.subr.mxu0 0.0
        %1383 = vmatpush1.msra.mxu0 0.0
        %1384 = vmatprep.subr.mxu0 0.0
        %1385 = vmatpush1.msra.mxu0 0.0
        %1386 = vmatprep.subr.mxu0 0.0
        %1387 = vmatpush1.msra.mxu0 0.0
        %1388 = vmatprep.subr.mxu0 0.0
        %1389 = vmatpush1.msra.mxu0 0.0
        %1390 = vmatprep.subr.mxu0 0.0
        %1391 = vmatpush1.msra.mxu0 0.0
        %1392 = vmatprep.subr.mxu0 0.0
        %1393 = vmatpush1.msra.mxu0 0.0
        %1394 = vmatprep.subr.mxu0 0.0
        %1395 = vmatpush1.msra.mxu0 0.0
        %1396 = vmatprep.subr.mxu0 0.0
        %1397 = vmatpush1.msra.mxu0 0.0
        %1398 = vmatprep.subr.mxu0 0.0
        %1399 = vmatpush1.msra.mxu0 0.0
        %1400 = vmatprep.subr.mxu0 0.0
        %1401 = vmatpush1.msra.mxu0 0.0
        %1402 = vmatprep.subr.mxu0 0.0
        %1403 = vmatpush1.msra.mxu0 0.0
        %1404 = vmatprep.subr.mxu0 0.0
        %1405 = vmatpush1.msra.mxu0 0.0
        %1406 = vmatprep.subr.mxu0 0.0
        %1407 = vmatpush1.msra.mxu0 0.0
        %1408 = vmatprep.subr.mxu0 0.0
        %1409 = vmatpush1.msra.mxu0 0.0
        %1410 = vmatprep.subr.mxu0 0.0
        %1411 = vmatpush1.msra.mxu0 0.0
        %1412 = vmatprep.subr.mxu0 0.0
        %1413 = vmatpush1.msra.mxu0 0.0
        %1414 = vmatprep.subr.mxu0 0.0
        %1415 = vmatpush1.msra.mxu0 0.0
        %1416 = vmatprep.subr.mxu0 0.0
        %1417 = vmatpush1.msra.mxu0 0.0
        %1418 = vmatprep.subr.mxu0 0.0
        %1419 = vmatpush1.msra.mxu0 0.0
        %1420 = vmatprep.subr.mxu0 0.0
        %1421 = vmatpush1.msra.mxu0 0.0
        %1422 = vmatprep.subr.mxu0 0.0
        %1423 = vmatpush1.msra.mxu0 0.0
        %1424 = vmatprep.subr.mxu0 0.0
        %1425 = vmatpush1.msra.mxu0 0.0
        %1426 = vmatprep.mubr.f32.mxu0 0.0
        %1427 = vmatmul.mubr.f32.gmra.mrb[0].mxu0 %v1354
        %v1428 = vpop.f32.mrb[0].mxu0
        %v1429 = vadd.f32 0.0, %v1428
        %v1430 = vpop.f32.mrb[0].mxu0
        %v1431 = vadd.f32 0.0, %v1430
        %1432 = vdwg.mxu0
        %v1433 = vadd.f32 %v1318, %v1429
        %v1434 = vadd.f32 %v1319, %v1431
        %v1435 = vld [vmem:[#allocation2] sm:$0x3f]
        %v1437 = vcombine.high %v1435, %v1435
        %v1439 = vunpack.c.l.s4 1983009808
        %v1440 = vunpack.c.0.s8 %v1439
        %v1441 = vlaneseq
        %v1442 = vshrl.u32 %v1441, 7
        %v1443 = vsub.s32 %v1440, %v1442
        %v1444 = vrot.slane %v1435, %v1443
        %v1446 = vunpack.c.l.s4 1983009808
        %v1447 = vunpack.c.0.s8 %v1446
        %v1448 = vlaneseq
        %v1449 = vshrl.u32 %v1448, 7
        %v1450 = vsub.s32 %v1447, %v1449
        %v1451 = vrot.slane %v1437, %v1450
        %v1452 = vcombine.high %v1444, %v1444
        %1453 = vrot.lane.b32.xlu0 %v1444, 96
        %v1454 = vpop.permute.xlu0 %1453
        %1455 = vrot.lane.b32.xlu0 %v1452, 96
        %v1456 = vpop.permute.xlu0 %1455
        %1457 = vrot.lane.b32.xlu0 %v1451, 96
        %v1458 = vpop.permute.xlu0 %1457
        %vm1459 = vcmask 785408
        %v1460 = vsel %vm1459, %v1454, %v1456
        %v1461 = vsel %vm1459, %v1456, %v1458
        %v1464 = vsel %vm774, %v1460, 0.0
        %v1465 = vsel %vm775, %v1461, 0.0
        %s1466 = scalar_lea.vmem %s7, 12
        %v1467 = vld [vmem:[%s1466] sm:$0x3]
        %v1469 = vsel %vm618, %v1467, 0
        %v1472 = vsel %vm622, %v1464, 0
        %v1475 = vsel %vm622, %v1465, 0
        %1477 = vmatprep.subr.mxu0 %v1475
        %1478 = vmatpush1.msra.mxu0 %v1472
        %1479 = vmatprep.subr.mxu0 0.0
        %1480 = vmatpush1.msra.mxu0 0.0
        %1481 = vmatprep.subr.mxu0 0.0
        %1482 = vmatpush1.msra.mxu0 0.0
        %1483 = vmatprep.subr.mxu0 0.0
        %1484 = vmatpush1.msra.mxu0 0.0
        %1485 = vmatprep.subr.mxu0 0.0
        %1486 = vmatpush1.msra.mxu0 0.0
        %1487 = vmatprep.subr.mxu0 0.0
        %1488 = vmatpush1.msra.mxu0 0.0
        %1489 = vmatprep.subr.mxu0 0.0
        %1490 = vmatpush1.msra.mxu0 0.0
        %1491 = vmatprep.subr.mxu0 0.0
        %1492 = vmatpush1.msra.mxu0 0.0
        %1493 = vmatprep.subr.mxu0 0.0
        %1494 = vmatpush1.msra.mxu0 0.0
        %1495 = vmatprep.subr.mxu0 0.0
        %1496 = vmatpush1.msra.mxu0 0.0
        %1497 = vmatprep.subr.mxu0 0.0
        %1498 = vmatpush1.msra.mxu0 0.0
        %1499 = vmatprep.subr.mxu0 0.0
        %1500 = vmatpush1.msra.mxu0 0.0
        %1501 = vmatprep.subr.mxu0 0.0
        %1502 = vmatpush1.msra.mxu0 0.0
        %1503 = vmatprep.subr.mxu0 0.0
        %1504 = vmatpush1.msra.mxu0 0.0
        %1505 = vmatprep.subr.mxu0 0.0
        %1506 = vmatpush1.msra.mxu0 0.0
        %1507 = vmatprep.subr.mxu0 0.0
        %1508 = vmatpush1.msra.mxu0 0.0
        %1509 = vmatprep.subr.mxu0 0.0
        %1510 = vmatpush1.msra.mxu0 0.0
        %1511 = vmatprep.subr.mxu0 0.0
        %1512 = vmatpush1.msra.mxu0 0.0
        %1513 = vmatprep.subr.mxu0 0.0
        %1514 = vmatpush1.msra.mxu0 0.0
        %1515 = vmatprep.subr.mxu0 0.0
        %1516 = vmatpush1.msra.mxu0 0.0
        %1517 = vmatprep.subr.mxu0 0.0
        %1518 = vmatpush1.msra.mxu0 0.0
        %1519 = vmatprep.subr.mxu0 0.0
        %1520 = vmatpush1.msra.mxu0 0.0
        %1521 = vmatprep.subr.mxu0 0.0
        %1522 = vmatpush1.msra.mxu0 0.0
        %1523 = vmatprep.subr.mxu0 0.0
        %1524 = vmatpush1.msra.mxu0 0.0
        %1525 = vmatprep.subr.mxu0 0.0
        %1526 = vmatpush1.msra.mxu0 0.0
        %1527 = vmatprep.subr.mxu0 0.0
        %1528 = vmatpush1.msra.mxu0 0.0
        %1529 = vmatprep.subr.mxu0 0.0
        %1530 = vmatpush1.msra.mxu0 0.0
        %1531 = vmatprep.subr.mxu0 0.0
        %1532 = vmatpush1.msra.mxu0 0.0
        %1533 = vmatprep.subr.mxu0 0.0
        %1534 = vmatpush1.msra.mxu0 0.0
        %1535 = vmatprep.subr.mxu0 0.0
        %1536 = vmatpush1.msra.mxu0 0.0
        %1537 = vmatprep.subr.mxu0 0.0
        %1538 = vmatpush1.msra.mxu0 0.0
        %1539 = vmatprep.subr.mxu0 0.0
        %1540 = vmatpush1.msra.mxu0 0.0
        %1541 = vmatprep.mubr.f32.mxu0 0.0
        %1542 = vmatmul.mubr.f32.gmra.mrb[0].mxu0 %v1469
        %v1543 = vpop.f32.mrb[0].mxu0
        %v1544 = vadd.f32 0.0, %v1543
        %v1545 = vpop.f32.mrb[0].mxu0
        %v1546 = vadd.f32 0.0, %v1545
        %1547 = vdwg.mxu0
        %v1548 = vadd.f32 %v1433, %v1544
        %v1549 = vadd.f32 %v1434, %v1546
        %v1550 = vld [vmem:[#allocation2] sm:$0x3f]
        %s1551 = scalar_lea.vmem %s7, 14
        %v1552 = vld [vmem:[%s1551] sm:$0x3]
        %v1554 = vcombine.high %v1550, %v1550
        %v1556 = vunpack.c.l.s4 1983009808
        %v1557 = vunpack.c.0.s8 %v1556
        %v1558 = vlaneseq
        %v1559 = vshrl.u32 %v1558, 7
        %v1560 = vsub.s32 %v1557, %v1559
        %v1561 = vrot.slane %v1550, %v1560
        %v1563 = vunpack.c.l.s4 1983009808
        %v1564 = vunpack.c.0.s8 %v1563
        %v1565 = vlaneseq
        %v1566 = vshrl.u32 %v1565, 7
        %v1567 = vsub.s32 %v1564, %v1566
        %v1568 = vrot.slane %v1554, %v1567
        %v1569 = vcombine.high %v1561, %v1561
        %1570 = vrot.lane.b32.xlu0 %v1561, 95
        %v1571 = vpop.permute.xlu0 %1570
        %1572 = vrot.lane.b32.xlu0 %v1569, 95
        %v1573 = vpop.permute.xlu0 %1572
        %1574 = vrot.lane.b32.xlu0 %v1568, 95
        %v1575 = vpop.permute.xlu0 %1574
        %vm1576 = vcmask 777216
        %v1577 = vsel %vm1576, %v1571, %v1573
        %v1578 = vsel %vm1576, %v1573, %v1575
        %v1580 = vsel %vm618, %v1552, 0
        %v1582 = vsel %vm622, %v1577, 0
        %v1584 = vsel %vm622, %v1578, 0
        %1586 = vmatprep.subr.mxu0 %v1584
        %1587 = vmatpush1.msra.mxu0 %v1582
        %1588 = vmatprep.subr.mxu0 0.0
        %1589 = vmatpush1.msra.mxu0 0.0
        %1590 = vmatprep.subr.mxu0 0.0
        %1591 = vmatpush1.msra.mxu0 0.0
        %1592 = vmatprep.subr.mxu0 0.0
        %1593 = vmatpush1.msra.mxu0 0.0
        %1594 = vmatprep.subr.mxu0 0.0
        %1595 = vmatpush1.msra.mxu0 0.0
        %1596 = vmatprep.subr.mxu0 0.0
        %1597 = vmatpush1.msra.mxu0 0.0
        %1598 = vmatprep.subr.mxu0 0.0
        %1599 = vmatpush1.msra.mxu0 0.0
        %1600 = vmatprep.subr.mxu0 0.0
        %1601 = vmatpush1.msra.mxu0 0.0
        %1602 = vmatprep.subr.mxu0 0.0
        %1603 = vmatpush1.msra.mxu0 0.0
        %1604 = vmatprep.subr.mxu0 0.0
        %1605 = vmatpush1.msra.mxu0 0.0
        %1606 = vmatprep.subr.mxu0 0.0
        %1607 = vmatpush1.msra.mxu0 0.0
        %1608 = vmatprep.subr.mxu0 0.0
        %1609 = vmatpush1.msra.mxu0 0.0
        %1610 = vmatprep.subr.mxu0 0.0
        %1611 = vmatpush1.msra.mxu0 0.0
        %1612 = vmatprep.subr.mxu0 0.0
        %1613 = vmatpush1.msra.mxu0 0.0
        %1614 = vmatprep.subr.mxu0 0.0
        %1615 = vmatpush1.msra.mxu0 0.0
        %1616 = vmatprep.subr.mxu0 0.0
        %1617 = vmatpush1.msra.mxu0 0.0
        %1618 = vmatprep.subr.mxu0 0.0
        %1619 = vmatpush1.msra.mxu0 0.0
        %1620 = vmatprep.subr.mxu0 0.0
        %1621 = vmatpush1.msra.mxu0 0.0
        %1622 = vmatprep.subr.mxu0 0.0
        %1623 = vmatpush1.msra.mxu0 0.0
        %1624 = vmatprep.subr.mxu0 0.0
        %1625 = vmatpush1.msra.mxu0 0.0
        %1626 = vmatprep.subr.mxu0 0.0
        %1627 = vmatpush1.msra.mxu0 0.0
        %1628 = vmatprep.subr.mxu0 0.0
        %1629 = vmatpush1.msra.mxu0 0.0
        %1630 = vmatprep.subr.mxu0 0.0
        %1631 = vmatpush1.msra.mxu0 0.0
        %1632 = vmatprep.subr.mxu0 0.0
        %1633 = vmatpush1.msra.mxu0 0.0
        %1634 = vmatprep.subr.mxu0 0.0
        %1635 = vmatpush1.msra.mxu0 0.0
        %1636 = vmatprep.subr.mxu0 0.0
        %1637 = vmatpush1.msra.mxu0 0.0
        %1638 = vmatprep.subr.mxu0 0.0
        %1639 = vmatpush1.msra.mxu0 0.0
        %1640 = vmatprep.subr.mxu0 0.0
        %1641 = vmatpush1.msra.mxu0 0.0
        %1642 = vmatprep.subr.mxu0 0.0
        %1643 = vmatpush1.msra.mxu0 0.0
        %1644 = vmatprep.subr.mxu0 0.0
        %1645 = vmatpush1.msra.mxu0 0.0
        %1646 = vmatprep.subr.mxu0 0.0
        %1647 = vmatpush1.msra.mxu0 0.0
        %1648 = vmatprep.subr.mxu0 0.0
        %1649 = vmatpush1.msra.mxu0 0.0
        %1650 = vmatprep.mubr.f32.mxu0 0.0
        %1651 = vmatmul.mubr.f32.gmra.mrb[0].mxu0 %v1580
        %v1652 = vpop.f32.mrb[0].mxu0
        %v1653 = vadd.f32 0.0, %v1652
        %v1654 = vpop.f32.mrb[0].mxu0
        %v1655 = vadd.f32 0.0, %v1654
        %1656 = vdwg.mxu0
        %v1657 = vadd.f32 %v1548, %v1653
        %v1658 = vadd.f32 %v1549, %v1655
        %v1659 = vld [vmem:[#allocation2] sm:$0x3f]
        %v1661 = vcombine.high %v1659, %v1659
        %v1663 = vunpack.c.l.s4 1983009808
        %v1664 = vunpack.c.0.s8 %v1663
        %v1665 = vlaneseq
        %v1666 = vshrl.u32 %v1665, 7
        %v1667 = vsub.s32 %v1664, %v1666
        %v1668 = vrot.slane %v1659, %v1667
        %v1670 = vunpack.c.l.s4 1983009808
        %v1671 = vunpack.c.0.s8 %v1670
        %v1672 = vlaneseq
        %v1673 = vshrl.u32 %v1672, 7
        %v1674 = vsub.s32 %v1671, %v1673
        %v1675 = vrot.slane %v1661, %v1674
        %v1676 = vcombine.high %v1668, %v1668
        %1677 = vrot.lane.b32.xlu0 %v1668, 94
        %v1678 = vpop.permute.xlu0 %1677
        %1679 = vrot.lane.b32.xlu0 %v1676, 94
        %v1680 = vpop.permute.xlu0 %1679
        %1681 = vrot.lane.b32.xlu0 %v1675, 94
        %v1682 = vpop.permute.xlu0 %1681
        %vm1683 = vcmask 769024
        %v1684 = vsel %vm1683, %v1678, %v1680
        %v1685 = vsel %vm1683, %v1680, %v1682
        %v1688 = vsel %vm980, %v1684, 0.0
        %v1689 = vsel %vm981, %v1685, 0.0
        %s1690 = scalar_lea.vmem %s7, 16
        %v1691 = vld [vmem:[%s1690] sm:$0x3]
        %v1693 = vsel %vm618, %v1691, 0
        %v1696 = vsel %vm622, %v1688, 0
        %v1699 = vsel %vm622, %v1689, 0
        %1701 = vmatprep.subr.mxu0 %v1699
        %1702 = vmatpush1.msra.mxu0 %v1696
        %1703 = vmatprep.subr.mxu0 0.0
        %1704 = vmatpush1.msra.mxu0 0.0
        %1705 = vmatprep.subr.mxu0 0.0
        %1706 = vmatpush1.msra.mxu0 0.0
        %1707 = vmatprep.subr.mxu0 0.0
        %1708 = vmatpush1.msra.mxu0 0.0
        %1709 = vmatprep.subr.mxu0 0.0
        %1710 = vmatpush1.msra.mxu0 0.0
        %1711 = vmatprep.subr.mxu0 0.0
        %1712 = vmatpush1.msra.mxu0 0.0
        %1713 = vmatprep.subr.mxu0 0.0
        %1714 = vmatpush1.msra.mxu0 0.0
        %1715 = vmatprep.subr.mxu0 0.0
        %1716 = vmatpush1.msra.mxu0 0.0
        %1717 = vmatprep.subr.mxu0 0.0
        %1718 = vmatpush1.msra.mxu0 0.0
        %1719 = vmatprep.subr.mxu0 0.0
        %1720 = vmatpush1.msra.mxu0 0.0
        %1721 = vmatprep.subr.mxu0 0.0
        %1722 = vmatpush1.msra.mxu0 0.0
        %1723 = vmatprep.subr.mxu0 0.0
        %1724 = vmatpush1.msra.mxu0 0.0
        %1725 = vmatprep.subr.mxu0 0.0
        %1726 = vmatpush1.msra.mxu0 0.0
        %1727 = vmatprep.subr.mxu0 0.0
        %1728 = vmatpush1.msra.mxu0 0.0
        %1729 = vmatprep.subr.mxu0 0.0
        %1730 = vmatpush1.msra.mxu0 0.0
        %1731 = vmatprep.subr.mxu0 0.0
        %1732 = vmatpush1.msra.mxu0 0.0
        %1733 = vmatprep.subr.mxu0 0.0
        %1734 = vmatpush1.msra.mxu0 0.0
        %1735 = vmatprep.subr.mxu0 0.0
        %1736 = vmatpush1.msra.mxu0 0.0
        %1737 = vmatprep.subr.mxu0 0.0
        %1738 = vmatpush1.msra.mxu0 0.0
        %1739 = vmatprep.subr.mxu0 0.0
        %1740 = vmatpush1.msra.mxu0 0.0
        %1741 = vmatprep.subr.mxu0 0.0
        %1742 = vmatpush1.msra.mxu0 0.0
        %1743 = vmatprep.subr.mxu0 0.0
        %1744 = vmatpush1.msra.mxu0 0.0
        %1745 = vmatprep.subr.mxu0 0.0
        %1746 = vmatpush1.msra.mxu0 0.0
        %1747 = vmatprep.subr.mxu0 0.0
        %1748 = vmatpush1.msra.mxu0 0.0
        %1749 = vmatprep.subr.mxu0 0.0
        %1750 = vmatpush1.msra.mxu0 0.0
        %1751 = vmatprep.subr.mxu0 0.0
        %1752 = vmatpush1.msra.mxu0 0.0
        %1753 = vmatprep.subr.mxu0 0.0
        %1754 = vmatpush1.msra.mxu0 0.0
        %1755 = vmatprep.subr.mxu0 0.0
        %1756 = vmatpush1.msra.mxu0 0.0
        %1757 = vmatprep.subr.mxu0 0.0
        %1758 = vmatpush1.msra.mxu0 0.0
        %1759 = vmatprep.subr.mxu0 0.0
        %1760 = vmatpush1.msra.mxu0 0.0
        %1761 = vmatprep.subr.mxu0 0.0
        %1762 = vmatpush1.msra.mxu0 0.0
        %1763 = vmatprep.subr.mxu0 0.0
        %1764 = vmatpush1.msra.mxu0 0.0
        %1765 = vmatprep.mubr.f32.mxu0 0.0
        %1766 = vmatmul.mubr.f32.gmra.mrb[0].mxu0 %v1693
        %v1767 = vpop.f32.mrb[0].mxu0
        %v1768 = vadd.f32 0.0, %v1767
        %v1769 = vpop.f32.mrb[0].mxu0
        %v1770 = vadd.f32 0.0, %v1769
        %1771 = vdwg.mxu0
        %v1772 = vadd.f32 %v1657, %v1768
        %v1773 = vadd.f32 %v1658, %v1770
        %v1774 = vld [vmem:[%s8] sm:$0x3]
        %1776 = vset.pattern.permute.xlu0 0
        %1777 = vperm.xlu0 %1776, %v1774
        %v1778 = vpop.permute.xlu0 %1777
        %v1780 = vadd.f32 %v1772, %v1778
        %v1781 = vadd.f32 %v1773, %v1778
        %v1782 = vsub.f32 0.0, %v1780
        %v1783 = vsub.f32 0.0, %v1781
        %v1784 = vmul.f32 %v1782, 1.442695
        %v1785 = vpow.pop %v1784
        %v1786 = vmul.f32 %v1783, 1.442695
        %v1787 = vpow.pop %v1786
        %v1788 = vadd.f32 %v1785, 1.0
        %v1789 = vadd.f32 %v1787, 1.0
        %v1790 = vrcp.pop %v1788
        %v1791 = vmul.f32 1.0, %v1790
        %v1792 = vrcp.pop %v1789
        %v1793 = vmul.f32 1.0, %v1792
        %v1794 = vmul.f32 %v1780, %v1791
        %v1795 = vmul.f32 %v1781, %v1793
        %v1796 = vadd.f32 %v514, %v1794
        %v1797 = vadd.f32 %v515, %v1795
        %v1798 = vld [vmem:[%s9] sm:$0xf]
        %v1799 = vld [vmem:[%s10] sm:$0xf]
        %v1801 = vsel %vm618, %v1799, 0
        %v1804 = vsel %vm622, %v609, 0
        %v1807 = vsel %vm622, %v610, 0
        %1809 = vmatprep.subr.mxu0 %v1807
        %1810 = vmatpush1.msra.mxu0 %v1804
        %1811 = vmatprep.subr.mxu0 0.0
        %1812 = vmatpush1.msra.mxu0 0.0
        %1813 = vmatprep.subr.mxu0 0.0
        %1814 = vmatpush1.msra.mxu0 0.0
        %1815 = vmatprep.subr.mxu0 0.0
        %1816 = vmatpush1.msra.mxu0 0.0
        %1817 = vmatprep.subr.mxu0 0.0
        %1818 = vmatpush1.msra.mxu0 0.0
        %1819 = vmatprep.subr.mxu0 0.0
        %1820 = vmatpush1.msra.mxu0 0.0
        %1821 = vmatprep.subr.mxu0 0.0
        %1822 = vmatpush1.msra.mxu0 0.0
        %1823 = vmatprep.subr.mxu0 0.0
        %1824 = vmatpush1.msra.mxu0 0.0
        %1825 = vmatprep.subr.mxu0 0.0
        %1826 = vmatpush1.msra.mxu0 0.0
        %1827 = vmatprep.subr.mxu0 0.0
        %1828 = vmatpush1.msra.mxu0 0.0
        %1829 = vmatprep.subr.mxu0 0.0
        %1830 = vmatpush1.msra.mxu0 0.0
        %1831 = vmatprep.subr.mxu0 0.0
        %1832 = vmatpush1.msra.mxu0 0.0
        %1833 = vmatprep.subr.mxu0 0.0
        %1834 = vmatpush1.msra.mxu0 0.0
        %1835 = vmatprep.subr.mxu0 0.0
        %1836 = vmatpush1.msra.mxu0 0.0
        %1837 = vmatprep.subr.mxu0 0.0
        %1838 = vmatpush1.msra.mxu0 0.0
        %1839 = vmatprep.subr.mxu0 0.0
        %1840 = vmatpush1.msra.mxu0 0.0
        %1841 = vmatprep.subr.mxu0 0.0
        %1842 = vmatpush1.msra.mxu0 0.0
        %1843 = vmatprep.subr.mxu0 0.0
        %1844 = vmatpush1.msra.mxu0 0.0
        %1845 = vmatprep.subr.mxu0 0.0
        %1846 = vmatpush1.msra.mxu0 0.0
        %1847 = vmatprep.subr.mxu0 0.0
        %1848 = vmatpush1.msra.mxu0 0.0
        %1849 = vmatprep.subr.mxu0 0.0
        %1850 = vmatpush1.msra.mxu0 0.0
        %1851 = vmatprep.subr.mxu0 0.0
        %1852 = vmatpush1.msra.mxu0 0.0
        %1853 = vmatprep.subr.mxu0 0.0
        %1854 = vmatpush1.msra.mxu0 0.0
        %1855 = vmatprep.subr.mxu0 0.0
        %1856 = vmatpush1.msra.mxu0 0.0
        %1857 = vmatprep.subr.mxu0 0.0
        %1858 = vmatpush1.msra.mxu0 0.0
        %1859 = vmatprep.subr.mxu0 0.0
        %1860 = vmatpush1.msra.mxu0 0.0
        %1861 = vmatprep.subr.mxu0 0.0
        %1862 = vmatpush1.msra.mxu0 0.0
        %1863 = vmatprep.subr.mxu0 0.0
        %1864 = vmatpush1.msra.mxu0 0.0
        %1865 = vmatprep.subr.mxu0 0.0
        %1866 = vmatpush1.msra.mxu0 0.0
        %1867 = vmatprep.subr.mxu0 0.0
        %1868 = vmatpush1.msra.mxu0 0.0
        %1869 = vmatprep.subr.mxu0 0.0
        %1870 = vmatpush1.msra.mxu0 0.0
        %1871 = vmatprep.subr.mxu0 0.0
        %1872 = vmatpush1.msra.mxu0 0.0
        %1873 = vmatprep.mubr.f32.mxu0 0.0
        %1874 = vmatmul.mubr.f32.gmra.mrb[0].mxu0 %v1801
        %v1875 = vpop.f32.mrb[0].mxu0
        %v1876 = vadd.f32 0.0, %v1875
        %v1877 = vpop.f32.mrb[0].mxu0
        %v1878 = vadd.f32 0.0, %v1877
        %1879 = vdwg.mxu0
        %v1881 = vsel %vm618, %v1798, 0
        %v1884 = vsel %vm622, %v1796, 0
        %v1887 = vsel %vm622, %v1797, 0
        %1889 = vmatprep.subr.mxu0 %v1887
        %1890 = vmatpush1.msra.mxu0 %v1884
        %1891 = vmatprep.subr.mxu0 0.0
        %1892 = vmatpush1.msra.mxu0 0.0
        %1893 = vmatprep.subr.mxu0 0.0
        %1894 = vmatpush1.msra.mxu0 0.0
        %1895 = vmatprep.subr.mxu0 0.0
        %1896 = vmatpush1.msra.mxu0 0.0
        %1897 = vmatprep.subr.mxu0 0.0
        %1898 = vmatpush1.msra.mxu0 0.0
        %1899 = vmatprep.subr.mxu0 0.0
        %1900 = vmatpush1.msra.mxu0 0.0
        %1901 = vmatprep.subr.mxu0 0.0
        %1902 = vmatpush1.msra.mxu0 0.0
        %1903 = vmatprep.subr.mxu0 0.0
        %1904 = vmatpush1.msra.mxu0 0.0
        %1905 = vmatprep.subr.mxu0 0.0
        %1906 = vmatpush1.msra.mxu0 0.0
        %1907 = vmatprep.subr.mxu0 0.0
        %1908 = vmatpush1.msra.mxu0 0.0
        %1909 = vmatprep.subr.mxu0 0.0
        %1910 = vmatpush1.msra.mxu0 0.0
        %1911 = vmatprep.subr.mxu0 0.0
        %1912 = vmatpush1.msra.mxu0 0.0
        %1913 = vmatprep.subr.mxu0 0.0
        %1914 = vmatpush1.msra.mxu0 0.0
        %1915 = vmatprep.subr.mxu0 0.0
        %1916 = vmatpush1.msra.mxu0 0.0
        %1917 = vmatprep.subr.mxu0 0.0
        %1918 = vmatpush1.msra.mxu0 0.0
        %1919 = vmatprep.subr.mxu0 0.0
        %1920 = vmatpush1.msra.mxu0 0.0
        %1921 = vmatprep.subr.mxu0 0.0
        %1922 = vmatpush1.msra.mxu0 0.0
        %1923 = vmatprep.subr.mxu0 0.0
        %1924 = vmatpush1.msra.mxu0 0.0
        %1925 = vmatprep.subr.mxu0 0.0
        %1926 = vmatpush1.msra.mxu0 0.0
        %1927 = vmatprep.subr.mxu0 0.0
        %1928 = vmatpush1.msra.mxu0 0.0
        %1929 = vmatprep.subr.mxu0 0.0
        %1930 = vmatpush1.msra.mxu0 0.0
        %1931 = vmatprep.subr.mxu0 0.0
        %1932 = vmatpush1.msra.mxu0 0.0
        %1933 = vmatprep.subr.mxu0 0.0
        %1934 = vmatpush1.msra.mxu0 0.0
        %1935 = vmatprep.subr.mxu0 0.0
        %1936 = vmatpush1.msra.mxu0 0.0
        %1937 = vmatprep.subr.mxu0 0.0
        %1938 = vmatpush1.msra.mxu0 0.0
        %1939 = vmatprep.subr.mxu0 0.0
        %1940 = vmatpush1.msra.mxu0 0.0
        %1941 = vmatprep.subr.mxu0 0.0
        %1942 = vmatpush1.msra.mxu0 0.0
        %1943 = vmatprep.subr.mxu0 0.0
        %1944 = vmatpush1.msra.mxu0 0.0
        %1945 = vmatprep.subr.mxu0 0.0
        %1946 = vmatpush1.msra.mxu0 0.0
        %1947 = vmatprep.subr.mxu0 0.0
        %1948 = vmatpush1.msra.mxu0 0.0
        %1949 = vmatprep.subr.mxu0 0.0
        %1950 = vmatpush1.msra.mxu0 0.0
        %1951 = vmatprep.subr.mxu0 0.0
        %1952 = vmatpush1.msra.mxu0 0.0
        %1953 = vmatprep.mubr.f32.mxu0 0.0
        %1954 = vmatmul.mubr.f32.gmra.mrb[0].mxu0 %v1881
        %v1955 = vpop.f32.mrb[0].mxu0
        %v1956 = vadd.f32 %v1876, %v1955
        %v1957 = vpop.f32.mrb[0].mxu0
        %v1958 = vadd.f32 %v1878, %v1957
        %1959 = vdwg.mxu0
        %v1960 = vld [vmem:[%s11] sm:$0xf]
        %1962 = vset.pattern.permute.xlu0 0
        %1963 = vperm.xlu0 %1962, %v1960
        %v1964 = vpop.permute.xlu0 %1963
        %v1966 = vadd.f32 %v1956, %v1964
        %v1967 = vadd.f32 %v1958, %v1964
        %v1968 = vsub.f32 0.0, %v1966
        %v1969 = vsub.f32 0.0, %v1967
        %v1970 = vmul.f32 %v1968, 1.442695
        %v1971 = vpow.pop %v1970
        %v1972 = vmul.f32 %v1969, 1.442695
        %v1973 = vpow.pop %v1972
        %v1974 = vadd.f32 %v1971, 1.0
        %v1975 = vadd.f32 %v1973, 1.0
        %v1976 = vrcp.pop %v1974
        %v1977 = vmul.f32 1.0, %v1976
        %v1978 = vrcp.pop %v1975
        %v1979 = vmul.f32 1.0, %v1978
        %v1980 = vmul.f32 %v1966, %v1977
        %v1981 = vmul.f32 %v1967, %v1979
        %v1984 = vcombine.low %v1980, %v1981
        %1986 = vst [vmem:[%s406] sm:$0xff] %v1984
        %s1987 = sand.u32 %s291, 1
        %s1988 = scalar_lea.sflag [#allocation4], %s1987
        %s1989 = sand.u32 %s291, 1
        %s1990 = smul.addr %s1989, 8
        %s1991 = scalar_lea.vmem [#allocation3], %s1990
        // Predicated region
        $region69: #{tpu_custom_call.1} parent=67 // pred_check
          %p1992 = pneg %p301
        $region70: #{tpu_custom_call.1} parent=67 // pred_check_branch
          %1994 = sbr.rel (%p1992) target = $region72
        $region71: #{tpu_custom_call.1} parent=67 // pred_region
          %s1996 = ssub.s32 128, 128
          %1997 = vsyncadd %s1988, %s1996
          %s1998 = smul.addr %s26, 2
          %s1999 = smul.addr %s1998, 64
          %s2000 = scalar_lea.hbm %s12, %s1999
          %s2002 = sshll.u32 %s1991, 4
          %s2003 = int_to_ptr.vmem [resolvable:$true] %s2002
          %2005 = dma.vmem_to_hbm [thread:$0]  %s2003, 128, %s2000, %s1988
        $region72: #{tpu_custom_call.1} parent=67 // pred_fallthru
          _
      $region68: #{tpu_custom_call.1} parent=5 // pred_fallthru
        _
      %p2006 = scmp.le.s32.totalorder 2, %s21
      // Predicated region
      $region73: #{tpu_custom_call.1} parent=5 // pred_check
        %p2007 = pneg %p2006
      $region74: #{tpu_custom_call.1} parent=5 // pred_check_branch
        %2009 = sbr.rel (%p2007) target = $region76
      $region75: #{tpu_custom_call.1} parent=5 // pred_region
        %s2010 = ssub.s32 %s21, 2
        // Predicated region
        $region77: #{tpu_custom_call.1} parent=75 // pred_check
          %p2011 = pneg %p307
        $region78: #{tpu_custom_call.1} parent=75 // pred_check_branch
          %2013 = sbr.rel (%p2011) target = $region80
        $region79: #{tpu_custom_call.1} parent=75 // pred_region
          %s2014 = sand.u32 %s292, 1
          %s2015 = scalar_lea.sflag [#allocation4], %s2014
          %s2016 = sand.u32 %s292, 1
          %s2017 = smul.addr %s2016, 8
          %s2018 = scalar_lea.vmem [#allocation3], %s2017
          %2019 = dma.done %s2015, 128
        $region80: #{tpu_custom_call.1} parent=75 // pred_fallthru
          _
      $region76: #{tpu_custom_call.1} parent=5 // pred_fallthru
        _
    $region6: #{tpu_custom_call.1} parent=1 // loop_footer
      %s25 = sadd.s32 1, %s21
    $region7: #{tpu_custom_call.1} parent=1 // loop_footer_branch
      %20 = sbr.rel target = $region3
    $region8: #{tpu_custom_call.1} parent=1 // loop_exit
      _
    %2020 = vsyncpa [#allocation4], 1
    %s2021 = scalar_lea.sflag [#allocation4], 1
    %2022 = vsyncpa %s2021, 1

</llo_original>
